<compile_context>
chip_gen: v7x
topology: tpu7x:2x2x1
jax: 0.10.0
libtpu: 0.0.40
codegen_flags: <defaults>
</compile_context>

<pallas_src>
import jax
import jax.numpy as jnp
from jax import lax
from jax.experimental import pallas as pl
from jax.experimental.pallas import tpu as pltpu


# ----------------------------- Pallas kernel -------------------------------
def lstm_fc_kernel(x_ref,        # (S*Bp, Xe)  bf16  time-major X-embedding half only
                   bias0_ref,    # (S*Bp, 4H)  f32   col_bias + b0, expanded over batch
                   wih0x_ref,    # (Xe, 4H)    bf16  layer-0 input proj (X-emb half)
                   whh0_ref,     # (H, 4H)     bf16  layer-0 recurrent
                   wih1_ref,     # (H, 4H)     bf16  layer-1 input proj
                   whh1_ref,     # (H, 4H)     bf16  layer-1 recurrent
                   b1_ref,       # (1, 4H)     f32   layer-1 combined bias
                   wfc_ref,      # (H, 128)    bf16  fc weight, zero-padded lanes
                   bfc_ref,      # (1, 128)    f32   fc bias,   zero-padded lanes
                   out_ref):     # (Bp, 128)   f32   lane-dense output
    Bp, _ = out_ref.shape
    SBp, _ = x_ref.shape
    S = SBp // Bp
    G = whh0_ref.shape[1]          # 4*H
    H = G // 4
    f32 = jnp.float32

    # ---- hoisted weight / bias loads (loaded once, stay vreg/VMEM resident) ----
    whh0 = whh0_ref[...]                                   # (H, 4H)
    whh1 = whh1_ref[...]                                   # (H, 4H)
    wih1 = wih1_ref[...]                                   # (H, 4H)
    mdt = whh0.dtype                                       # matmul operand dtype (bf16)
    b1b = jnp.broadcast_to(b1_ref[...], (Bp, G))           # broadcast hoisted out of loop

    # ---- precompute layer-0 input projection for ALL timesteps (off-chain) ----
    # bias0 already contains (column_matrix @ wih0_col + b0) per timestep.
    pre0 = (jnp.dot(x_ref[...], wih0x_ref[...], preferred_element_type=f32)
            + bias0_ref[...])                              # (S*Bp, 4H) f32

    # ---- hoisted activation constants: sigmoid via tanh (one EUP pass) ----
    # sigmoid lanes: tanh(0.5*x)*0.5 + 0.5 ; g-gate lanes: tanh(x)*1.0 + 0.0
    lane = lax.broadcasted_iota(jnp.int32, (Bp, G), 1)
    g_mask = (lane >= 2 * H) & (lane < 3 * H)
    act_scale = jnp.where(g_mask, jnp.float32(1.0), jnp.float32(0.5))   # (Bp, G)
    act_offset = jnp.where(g_mask, jnp.float32(0.0), jnp.float32(0.5))  # (Bp, G)

    def activate(gates):
        # One full-width tanh + 2 VALU ops instead of tanh + sigmoid.
        return jnp.tanh(gates * act_scale) * act_scale + act_offset

    def combine(act, c_prev):
        # TODO(synk): if bundle dump shows masked VALU selects for these 32-lane
        # slices, realign with pltpu.roll (XLU slot is idle) — micro-opt, unverified.
        i = act[:, 0 * H:1 * H]
        f = act[:, 1 * H:2 * H]
        g = act[:, 2 * H:3 * H]
        o = act[:, 3 * H:4 * H]
        c_new = f * c_prev + i * g
        h_new = o * jnp.tanh(c_new)
        return h_new, c_new

    # ---- recurrence: fully unrolled (S static), state carried in vregs ----
    h0 = jnp.zeros((Bp, H), f32)
    c0 = jnp.zeros((Bp, H), f32)
    h1 = jnp.zeros((Bp, H), f32)
    c1 = jnp.zeros((Bp, H), f32)

    for t in range(S):
        # Both recurrent matmuls issue at step top from previous-step states:
        # neither sits behind this step's layer-0 activation.
        rec0 = jnp.dot(h0.astype(mdt), whh0, preferred_element_type=f32)      # (Bp,4H)
        rec1 = jnp.dot(h1.astype(mdt), whh1, preferred_element_type=f32) + b1b

        # Layer 0: spine = rec0 + activate/combine.
        gates0 = pre0[t * Bp:(t + 1) * Bp, :] + rec0
        h0, c0 = combine(activate(gates0), c0)

        # Layer 1: only h0_new @ Wih1 is on the dependent path (rec1 already done).
        gates1 = rec1 + jnp.dot(h0.astype(mdt), wih1, preferred_element_type=f32)
        h1, c1 = combine(activate(gates1), c1)

    # Final FC on the last hidden state; lane-dense (Bp, 128) store.
    out_ref[...] = (jnp.dot(h1.astype(wfc_ref.dtype), wfc_ref[...],
                            preferred_element_type=f32)
                    + bfc_ref[...]).astype(out_ref.dtype)


# ------------------------------ JAX wrapper ---------------------------------
def lstm_model_forward(indices, params, *, matmul_dtype=jnp.bfloat16):
    """indices: (B, S) int32, S == n_features.  Returns (B, num_classes) f32."""
    X_matrix = params["X_matrix"]             # (X_max+1, X_emb)
    column_matrix = params["column_matrix"]   # (n_features, C_emb)
    B, S = indices.shape
    Xe = X_matrix.shape[1]
    H = params["whh0"].shape[0]
    G = 4 * H
    C = params["wfc"].shape[1]

    Bp = 8      # pad batch to one sublane tile
    Cp = 128    # lane-dense FC output width

    # ---- CustomEmbedding (X half only), time-major, batch zero-padded to Bp ----
    x_emb = jnp.take(X_matrix, indices.T, axis=0)                     # (S, B, Xe)
    x_pad = jnp.zeros((S, Bp, Xe), X_matrix.dtype).at[:, :B, :].set(x_emb)
    x_flat = x_pad.reshape(S * Bp, Xe).astype(matmul_dtype)           # (S*Bp, Xe)

    # ---- fold column-embedding contribution into a per-timestep bias (exact, f32) ----
    wih0 = params["wih0"]                                             # (Xe+Ce, 4H)
    wih0_x = wih0[:Xe, :]
    wih0_c = wih0[Xe:, :]
    col_bias = column_matrix.astype(jnp.float32) @ wih0_c.astype(jnp.float32)  # (S, 4H)
    bias0 = col_bias + params["b0"]                                   # (S, 4H)
    bias0_all = jnp.broadcast_to(bias0[:, None, :], (S, Bp, G)).reshape(S * Bp, G)

    # ---- zero-pad FC to 128 output lanes ----
    wfc_pad = jnp.zeros((H, Cp), jnp.float32).at[:, :C].set(params["wfc"])
    bfc_pad = jnp.zeros((1, Cp), jnp.float32).at[:, :C].set(params["bfc"])

    out = pl.pallas_call(
        lstm_fc_kernel,
        out_shape=jax.ShapeDtypeStruct((Bp, Cp), jnp.float32),
        in_specs=[pl.BlockSpec(memory_space=pltpu.MemorySpace.VMEM)] * 9,
        out_specs=pl.BlockSpec(memory_space=pltpu.MemorySpace.VMEM),
    )(x_flat,
      bias0_all,
      wih0_x.astype(matmul_dtype),
      params["whh0"].astype(matmul_dtype),
      params["wih1"].astype(matmul_dtype),
      params["whh1"].astype(matmul_dtype),
      params["b1"],
      wfc_pad.astype(matmul_dtype),
      bfc_pad)
    return out[:B, :C]


# --------------------------- pure-JAX reference ------------------------------
def reference_forward(indices, params):
    X_matrix = params["X_matrix"]
    column_matrix = params["column_matrix"]
    B, S = indices.shape
    x_emb = jnp.take(X_matrix, indices, axis=0)
    col_emb = jnp.broadcast_to(column_matrix[None, :, :],
                               (B, S, column_matrix.shape[1]))
    x = jnp.concatenate([x_emb, col_emb], axis=-1).astype(jnp.float32)

    H = params["whh0"].shape[0]

    def cell(x_t, h, c, wih, whh, b):
        gates = x_t @ wih + h @ whh + b
        i = jax.nn.sigmoid(gates[:, 0 * H:1 * H])
        f = jax.nn.sigmoid(gates[:, 1 * H:2 * H])
        g = jnp.tanh(gates[:, 2 * H:3 * H])
        o = jax.nn.sigmoid(gates[:, 3 * H:4 * H])
        c_new = f * c + i * g
        return o * jnp.tanh(c_new), c_new

    h0 = jnp.zeros((B, H), jnp.float32)
    c0 = jnp.zeros((B, H), jnp.float32)
    h1 = jnp.zeros((B, H), jnp.float32)
    c1 = jnp.zeros((B, H), jnp.float32)
    for t in range(S):
        h0, c0 = cell(x[:, t, :], h0, c0, params["wih0"], params["whh0"], params["b0"])
        h1, c1 = cell(h0, h1, c1, params["wih1"], params["whh1"], params["b1"])
    return h1 @ params["wfc"] + params["bfc"]


# --------------------------------- main --------------------------------------
if __name__ == "__main__":
    # Small, forward-consistent sizes.
    batch = 2
    n_features = 8            # seq_len == n_features (required by CustomEmbedding)
    X_embedding_dims = 8
    column_embedding_dim = 8
    input_size = X_embedding_dims + column_embedding_dim   # 16
    hidden_size = 32
    num_classes = 5
    X_min, X_max = 0, 20
    H4 = 4 * hidden_size

    key = jax.random.PRNGKey(0)
    ks = jax.random.split(key, 12)

    scale = 1.0 / jnp.sqrt(hidden_size)
    params = {
        # embedding tables (torch.rand -> uniform [0,1))
        "X_matrix": jax.random.uniform(ks[0], (X_max + 1, X_embedding_dims), jnp.float32),
        "column_matrix": jax.random.uniform(ks[1], (n_features, column_embedding_dim), jnp.float32),
        # LSTM layer 0 (weights stored pre-transposed: (in, 4H)); b = b_ih + b_hh combined
        "wih0": jax.random.uniform(ks[2], (input_size, H4), jnp.float32, -scale, scale),
        "whh0": jax.random.uniform(ks[3], (hidden_size, H4), jnp.float32, -scale, scale),
        "b0":   jax.random.uniform(ks[4], (1, H4), jnp.float32, -scale, scale),
        # LSTM layer 1
        "wih1": jax.random.uniform(ks[5], (hidden_size, H4), jnp.float32, -scale, scale),
        "whh1": jax.random.uniform(ks[6], (hidden_size, H4), jnp.float32, -scale, scale),
        "b1":   jax.random.uniform(ks[7], (1, H4), jnp.float32, -scale, scale),
        # fc
        "wfc":  jax.random.uniform(ks[8], (hidden_size, num_classes), jnp.float32, -scale, scale),
        "bfc":  jax.random.uniform(ks[9], (1, num_classes), jnp.float32, -scale, scale),
    }

    indices = jax.random.randint(ks[10], (batch, n_features), X_min, X_max + 1, dtype=jnp.int32)

    out = lstm_model_forward(indices, params)
    out = jax.block_until_ready(out)

    ref = reference_forward(indices, params)
    assert out.shape == (batch, num_classes)
    # bf16 matmul operands (f32 accumulation) on a short recurrent chain -> loose tol.
    assert jnp.allclose(out, ref, atol=4e-2, rtol=4e-2), "mismatch vs. JAX reference"

    print("KERNEL_OK")
</pallas_src>

<mosaic_0001>
module attributes {stable_mosaic.version = 11 : i64} {
  func.func @lstm_fc_kernel(%arg0: memref<64x8xbf16, #tpu.memory_space<vmem>>, %arg1: memref<64x128xf32, #tpu.memory_space<vmem>>, %arg2: memref<8x128xbf16, #tpu.memory_space<vmem>>, %arg3: memref<32x128xbf16, #tpu.memory_space<vmem>>, %arg4: memref<32x128xbf16, #tpu.memory_space<vmem>>, %arg5: memref<32x128xbf16, #tpu.memory_space<vmem>>, %arg6: memref<1x128xf32, #tpu.memory_space<vmem>>, %arg7: memref<32x128xbf16, #tpu.memory_space<vmem>>, %arg8: memref<1x128xf32, #tpu.memory_space<vmem>>, %arg9: memref<8x128xf32, #tpu.memory_space<vmem>>) attributes {dimension_semantics = [], scalar_prefetch = 0 : i64, scratch_operands = 0 : i64, tpu.core_type = #tpu.core_type<tc>} {
    %c0 = arith.constant 0 : index
    %c0_0 = arith.constant 0 : index
    %0 = vector.load %arg3[%c0, %c0_0] : memref<32x128xbf16, #tpu.memory_space<vmem>>, vector<32x128xbf16>
    %c0_1 = arith.constant 0 : index
    %c0_2 = arith.constant 0 : index
    %1 = vector.load %arg5[%c0_1, %c0_2] : memref<32x128xbf16, #tpu.memory_space<vmem>>, vector<32x128xbf16>
    %c0_3 = arith.constant 0 : index
    %c0_4 = arith.constant 0 : index
    %2 = vector.load %arg4[%c0_3, %c0_4] : memref<32x128xbf16, #tpu.memory_space<vmem>>, vector<32x128xbf16>
    %c0_5 = arith.constant 0 : index
    %c0_6 = arith.constant 0 : index
    %3 = vector.load %arg6[%c0_5, %c0_6] : memref<1x128xf32, #tpu.memory_space<vmem>>, vector<1x128xf32>
    %4 = vector.shape_cast %3 : vector<1x128xf32> to vector<1x128xf32>
    %5 = vector.broadcast %4 : vector<1x128xf32> to vector<8x128xf32>
    %c0_7 = arith.constant 0 : index
    %c0_8 = arith.constant 0 : index
    %6 = vector.load %arg0[%c0_7, %c0_8] : memref<64x8xbf16, #tpu.memory_space<vmem>>, vector<64x8xbf16>
    %c0_9 = arith.constant 0 : index
    %c0_10 = arith.constant 0 : index
    %7 = vector.load %arg2[%c0_9, %c0_10] : memref<8x128xbf16, #tpu.memory_space<vmem>>, vector<8x128xbf16>
    %cst = arith.constant dense<0.000000e+00> : vector<64x128xf32>
    %8 = tpu.matmul %6, %7, %cst {dimension_numbers = #tpu.dot_dimension_numbers<[1], [0], [0], [1], [0, 0, 1, 1], [], []>} : vector<64x8xbf16>, vector<8x128xbf16>, vector<64x128xf32> -> vector<64x128xf32>
    %c0_11 = arith.constant 0 : index
    %c0_12 = arith.constant 0 : index
    %9 = vector.load %arg1[%c0_11, %c0_12] : memref<64x128xf32, #tpu.memory_space<vmem>>, vector<64x128xf32>
    %10 = arith.addf %8, %9 : vector<64x128xf32>
    %11 = tpu.iota {dimensions = array<i32: 1>} : vector<8x128xi32>
    %c64_i32 = arith.constant 64 : i32
    %12 = vector.broadcast %c64_i32 : i32 to vector<8x128xi32>
    %13 = arith.cmpi sge, %11, %12 : vector<8x128xi32>
    %c96_i32 = arith.constant 96 : i32
    %14 = vector.broadcast %c96_i32 : i32 to vector<8x128xi32>
    %15 = arith.cmpi slt, %11, %14 : vector<8x128xi32>
    %16 = arith.andi %13, %15 : vector<8x128xi1>
    %cst_13 = arith.constant 1.000000e+00 : f32
    %cst_14 = arith.constant 5.000000e-01 : f32
    %17 = vector.broadcast %cst_13 : f32 to vector<8x128xf32>
    %18 = vector.broadcast %cst_14 : f32 to vector<8x128xf32>
    %19 = arith.select %16, %17, %18 : vector<8x128xi1>, vector<8x128xf32>
    %cst_15 = arith.constant 0.000000e+00 : f32
    %cst_16 = arith.constant 5.000000e-01 : f32
    %20 = vector.broadcast %cst_15 : f32 to vector<8x128xf32>
    %21 = vector.broadcast %cst_16 : f32 to vector<8x128xf32>
    %22 = arith.select %16, %20, %21 : vector<8x128xi1>, vector<8x128xf32>
    %cst_17 = arith.constant 0.000000e+00 : f32
    %23 = vector.broadcast %cst_17 : f32 to vector<8x32xf32>
    %cst_18 = arith.constant 0.000000e+00 : f32
    %24 = vector.broadcast %cst_18 : f32 to vector<8x32xf32>
    %cst_19 = arith.constant 0.000000e+00 : f32
    %25 = vector.broadcast %cst_19 : f32 to vector<8x32xf32>
    %cst_20 = arith.constant 0.000000e+00 : f32
    %26 = vector.broadcast %cst_20 : f32 to vector<8x32xf32>
    %27 = arith.truncf %23 : vector<8x32xf32> to vector<8x32xbf16>
    %cst_21 = arith.constant dense<0.000000e+00> : vector<8x128xf32>
    %28 = tpu.matmul %27, %0, %cst_21 {dimension_numbers = #tpu.dot_dimension_numbers<[1], [0], [0], [1], [0, 0, 1, 1], [], []>} : vector<8x32xbf16>, vector<32x128xbf16>, vector<8x128xf32> -> vector<8x128xf32>
    %29 = arith.truncf %25 : vector<8x32xf32> to vector<8x32xbf16>
    %cst_22 = arith.constant dense<0.000000e+00> : vector<8x128xf32>
    %30 = tpu.matmul %29, %1, %cst_22 {dimension_numbers = #tpu.dot_dimension_numbers<[1], [0], [0], [1], [0, 0, 1, 1], [], []>} : vector<8x32xbf16>, vector<32x128xbf16>, vector<8x128xf32> -> vector<8x128xf32>
    %31 = arith.addf %30, %5 : vector<8x128xf32>
    %32 = vector.extract_strided_slice %10 {offsets = [0, 0], sizes = [8, 128], strides = [1, 1]} : vector<64x128xf32> to vector<8x128xf32>
    %33 = arith.addf %32, %28 : vector<8x128xf32>
    %34 = arith.mulf %33, %19 : vector<8x128xf32>
    %35 = math.tanh %34 : vector<8x128xf32>
    %36 = arith.mulf %35, %19 : vector<8x128xf32>
    %37 = arith.addf %36, %22 : vector<8x128xf32>
    %38 = vector.extract_strided_slice %37 {offsets = [0, 0], sizes = [8, 32], strides = [1, 1]} : vector<8x128xf32> to vector<8x32xf32>
    %39 = vector.extract_strided_slice %37 {offsets = [0, 32], sizes = [8, 32], strides = [1, 1]} : vector<8x128xf32> to vector<8x32xf32>
    %40 = vector.extract_strided_slice %37 {offsets = [0, 64], sizes = [8, 32], strides = [1, 1]} : vector<8x128xf32> to vector<8x32xf32>
    %41 = vector.extract_strided_slice %37 {offsets = [0, 96], sizes = [8, 32], strides = [1, 1]} : vector<8x128xf32> to vector<8x32xf32>
    %42 = arith.mulf %39, %24 : vector<8x32xf32>
    %43 = arith.mulf %38, %40 : vector<8x32xf32>
    %44 = arith.addf %42, %43 : vector<8x32xf32>
    %45 = math.tanh %44 : vector<8x32xf32>
    %46 = arith.mulf %41, %45 : vector<8x32xf32>
    %47 = arith.truncf %46 : vector<8x32xf32> to vector<8x32xbf16>
    %cst_23 = arith.constant dense<0.000000e+00> : vector<8x128xf32>
    %48 = tpu.matmul %47, %2, %cst_23 {dimension_numbers = #tpu.dot_dimension_numbers<[1], [0], [0], [1], [0, 0, 1, 1], [], []>} : vector<8x32xbf16>, vector<32x128xbf16>, vector<8x128xf32> -> vector<8x128xf32>
    %49 = arith.addf %31, %48 : vector<8x128xf32>
    %50 = arith.mulf %49, %19 : vector<8x128xf32>
    %51 = math.tanh %50 : vector<8x128xf32>
    %52 = arith.mulf %51, %19 : vector<8x128xf32>
    %53 = arith.addf %52, %22 : vector<8x128xf32>
    %54 = vector.extract_strided_slice %53 {offsets = [0, 0], sizes = [8, 32], strides = [1, 1]} : vector<8x128xf32> to vector<8x32xf32>
    %55 = vector.extract_strided_slice %53 {offsets = [0, 32], sizes = [8, 32], strides = [1, 1]} : vector<8x128xf32> to vector<8x32xf32>
    %56 = vector.extract_strided_slice %53 {offsets = [0, 64], sizes = [8, 32], strides = [1, 1]} : vector<8x128xf32> to vector<8x32xf32>
    %57 = vector.extract_strided_slice %53 {offsets = [0, 96], sizes = [8, 32], strides = [1, 1]} : vector<8x128xf32> to vector<8x32xf32>
    %58 = arith.mulf %55, %26 : vector<8x32xf32>
    %59 = arith.mulf %54, %56 : vector<8x32xf32>
    %60 = arith.addf %58, %59 : vector<8x32xf32>
    %61 = math.tanh %60 : vector<8x32xf32>
    %62 = arith.mulf %57, %61 : vector<8x32xf32>
    %63 = arith.truncf %46 : vector<8x32xf32> to vector<8x32xbf16>
    %cst_24 = arith.constant dense<0.000000e+00> : vector<8x128xf32>
    %64 = tpu.matmul %63, %0, %cst_24 {dimension_numbers = #tpu.dot_dimension_numbers<[1], [0], [0], [1], [0, 0, 1, 1], [], []>} : vector<8x32xbf16>, vector<32x128xbf16>, vector<8x128xf32> -> vector<8x128xf32>
    %65 = arith.truncf %62 : vector<8x32xf32> to vector<8x32xbf16>
    %cst_25 = arith.constant dense<0.000000e+00> : vector<8x128xf32>
    %66 = tpu.matmul %65, %1, %cst_25 {dimension_numbers = #tpu.dot_dimension_numbers<[1], [0], [0], [1], [0, 0, 1, 1], [], []>} : vector<8x32xbf16>, vector<32x128xbf16>, vector<8x128xf32> -> vector<8x128xf32>
    %67 = arith.addf %66, %5 : vector<8x128xf32>
    %68 = vector.extract_strided_slice %10 {offsets = [8, 0], sizes = [8, 128], strides = [1, 1]} : vector<64x128xf32> to vector<8x128xf32>
    %69 = arith.addf %68, %64 : vector<8x128xf32>
    %70 = arith.mulf %69, %19 : vector<8x128xf32>
    %71 = math.tanh %70 : vector<8x128xf32>
    %72 = arith.mulf %71, %19 : vector<8x128xf32>
    %73 = arith.addf %72, %22 : vector<8x128xf32>
    %74 = vector.extract_strided_slice %73 {offsets = [0, 0], sizes = [8, 32], strides = [1, 1]} : vector<8x128xf32> to vector<8x32xf32>
    %75 = vector.extract_strided_slice %73 {offsets = [0, 32], sizes = [8, 32], strides = [1, 1]} : vector<8x128xf32> to vector<8x32xf32>
    %76 = vector.extract_strided_slice %73 {offsets = [0, 64], sizes = [8, 32], strides = [1, 1]} : vector<8x128xf32> to vector<8x32xf32>
    %77 = vector.extract_strided_slice %73 {offsets = [0, 96], sizes = [8, 32], strides = [1, 1]} : vector<8x128xf32> to vector<8x32xf32>
    %78 = arith.mulf %75, %44 : vector<8x32xf32>
    %79 = arith.mulf %74, %76 : vector<8x32xf32>
    %80 = arith.addf %78, %79 : vector<8x32xf32>
    %81 = math.tanh %80 : vector<8x32xf32>
    %82 = arith.mulf %77, %81 : vector<8x32xf32>
    %83 = arith.truncf %82 : vector<8x32xf32> to vector<8x32xbf16>
    %cst_26 = arith.constant dense<0.000000e+00> : vector<8x128xf32>
    %84 = tpu.matmul %83, %2, %cst_26 {dimension_numbers = #tpu.dot_dimension_numbers<[1], [0], [0], [1], [0, 0, 1, 1], [], []>} : vector<8x32xbf16>, vector<32x128xbf16>, vector<8x128xf32> -> vector<8x128xf32>
    %85 = arith.addf %67, %84 : vector<8x128xf32>
    %86 = arith.mulf %85, %19 : vector<8x128xf32>
    %87 = math.tanh %86 : vector<8x128xf32>
    %88 = arith.mulf %87, %19 : vector<8x128xf32>
    %89 = arith.addf %88, %22 : vector<8x128xf32>
    %90 = vector.extract_strided_slice %89 {offsets = [0, 0], sizes = [8, 32], strides = [1, 1]} : vector<8x128xf32> to vector<8x32xf32>
    %91 = vector.extract_strided_slice %89 {offsets = [0, 32], sizes = [8, 32], strides = [1, 1]} : vector<8x128xf32> to vector<8x32xf32>
    %92 = vector.extract_strided_slice %89 {offsets = [0, 64], sizes = [8, 32], strides = [1, 1]} : vector<8x128xf32> to vector<8x32xf32>
    %93 = vector.extract_strided_slice %89 {offsets = [0, 96], sizes = [8, 32], strides = [1, 1]} : vector<8x128xf32> to vector<8x32xf32>
    %94 = arith.mulf %91, %60 : vector<8x32xf32>
    %95 = arith.mulf %90, %92 : vector<8x32xf32>
    %96 = arith.addf %94, %95 : vector<8x32xf32>
    %97 = math.tanh %96 : vector<8x32xf32>
    %98 = arith.mulf %93, %97 : vector<8x32xf32>
    %99 = arith.truncf %82 : vector<8x32xf32> to vector<8x32xbf16>
    %cst_27 = arith.constant dense<0.000000e+00> : vector<8x128xf32>
    %100 = tpu.matmul %99, %0, %cst_27 {dimension_numbers = #tpu.dot_dimension_numbers<[1], [0], [0], [1], [0, 0, 1, 1], [], []>} : vector<8x32xbf16>, vector<32x128xbf16>, vector<8x128xf32> -> vector<8x128xf32>
    %101 = arith.truncf %98 : vector<8x32xf32> to vector<8x32xbf16>
    %cst_28 = arith.constant dense<0.000000e+00> : vector<8x128xf32>
    %102 = tpu.matmul %101, %1, %cst_28 {dimension_numbers = #tpu.dot_dimension_numbers<[1], [0], [0], [1], [0, 0, 1, 1], [], []>} : vector<8x32xbf16>, vector<32x128xbf16>, vector<8x128xf32> -> vector<8x128xf32>
    %103 = arith.addf %102, %5 : vector<8x128xf32>
    %104 = vector.extract_strided_slice %10 {offsets = [16, 0], sizes = [8, 128], strides = [1, 1]} : vector<64x128xf32> to vector<8x128xf32>
    %105 = arith.addf %104, %100 : vector<8x128xf32>
    %106 = arith.mulf %105, %19 : vector<8x128xf32>
    %107 = math.tanh %106 : vector<8x128xf32>
    %108 = arith.mulf %107, %19 : vector<8x128xf32>
    %109 = arith.addf %108, %22 : vector<8x128xf32>
    %110 = vector.extract_strided_slice %109 {offsets = [0, 0], sizes = [8, 32], strides = [1, 1]} : vector<8x128xf32> to vector<8x32xf32>
    %111 = vector.extract_strided_slice %109 {offsets = [0, 32], sizes = [8, 32], strides = [1, 1]} : vector<8x128xf32> to vector<8x32xf32>
    %112 = vector.extract_strided_slice %109 {offsets = [0, 64], sizes = [8, 32], strides = [1, 1]} : vector<8x128xf32> to vector<8x32xf32>
    %113 = vector.extract_strided_slice %109 {offsets = [0, 96], sizes = [8, 32], strides = [1, 1]} : vector<8x128xf32> to vector<8x32xf32>
    %114 = arith.mulf %111, %80 : vector<8x32xf32>
    %115 = arith.mulf %110, %112 : vector<8x32xf32>
    %116 = arith.addf %114, %115 : vector<8x32xf32>
    %117 = math.tanh %116 : vector<8x32xf32>
    %118 = arith.mulf %113, %117 : vector<8x32xf32>
    %119 = arith.truncf %118 : vector<8x32xf32> to vector<8x32xbf16>
    %cst_29 = arith.constant dense<0.000000e+00> : vector<8x128xf32>
    %120 = tpu.matmul %119, %2, %cst_29 {dimension_numbers = #tpu.dot_dimension_numbers<[1], [0], [0], [1], [0, 0, 1, 1], [], []>} : vector<8x32xbf16>, vector<32x128xbf16>, vector<8x128xf32> -> vector<8x128xf32>
    %121 = arith.addf %103, %120 : vector<8x128xf32>
    %122 = arith.mulf %121, %19 : vector<8x128xf32>
    %123 = math.tanh %122 : vector<8x128xf32>
    %124 = arith.mulf %123, %19 : vector<8x128xf32>
    %125 = arith.addf %124, %22 : vector<8x128xf32>
    %126 = vector.extract_strided_slice %125 {offsets = [0, 0], sizes = [8, 32], strides = [1, 1]} : vector<8x128xf32> to vector<8x32xf32>
    %127 = vector.extract_strided_slice %125 {offsets = [0, 32], sizes = [8, 32], strides = [1, 1]} : vector<8x128xf32> to vector<8x32xf32>
    %128 = vector.extract_strided_slice %125 {offsets = [0, 64], sizes = [8, 32], strides = [1, 1]} : vector<8x128xf32> to vector<8x32xf32>
    %129 = vector.extract_strided_slice %125 {offsets = [0, 96], sizes = [8, 32], strides = [1, 1]} : vector<8x128xf32> to vector<8x32xf32>
    %130 = arith.mulf %127, %96 : vector<8x32xf32>
    %131 = arith.mulf %126, %128 : vector<8x32xf32>
    %132 = arith.addf %130, %131 : vector<8x32xf32>
    %133 = math.tanh %132 : vector<8x32xf32>
    %134 = arith.mulf %129, %133 : vector<8x32xf32>
    %135 = arith.truncf %118 : vector<8x32xf32> to vector<8x32xbf16>
    %cst_30 = arith.constant dense<0.000000e+00> : vector<8x128xf32>
    %136 = tpu.matmul %135, %0, %cst_30 {dimension_numbers = #tpu.dot_dimension_numbers<[1], [0], [0], [1], [0, 0, 1, 1], [], []>} : vector<8x32xbf16>, vector<32x128xbf16>, vector<8x128xf32> -> vector<8x128xf32>
    %137 = arith.truncf %134 : vector<8x32xf32> to vector<8x32xbf16>
    %cst_31 = arith.constant dense<0.000000e+00> : vector<8x128xf32>
    %138 = tpu.matmul %137, %1, %cst_31 {dimension_numbers = #tpu.dot_dimension_numbers<[1], [0], [0], [1], [0, 0, 1, 1], [], []>} : vector<8x32xbf16>, vector<32x128xbf16>, vector<8x128xf32> -> vector<8x128xf32>
    %139 = arith.addf %138, %5 : vector<8x128xf32>
    %140 = vector.extract_strided_slice %10 {offsets = [24, 0], sizes = [8, 128], strides = [1, 1]} : vector<64x128xf32> to vector<8x128xf32>
    %141 = arith.addf %140, %136 : vector<8x128xf32>
    %142 = arith.mulf %141, %19 : vector<8x128xf32>
    %143 = math.tanh %142 : vector<8x128xf32>
    %144 = arith.mulf %143, %19 : vector<8x128xf32>
    %145 = arith.addf %144, %22 : vector<8x128xf32>
    %146 = vector.extract_strided_slice %145 {offsets = [0, 0], sizes = [8, 32], strides = [1, 1]} : vector<8x128xf32> to vector<8x32xf32>
    %147 = vector.extract_strided_slice %145 {offsets = [0, 32], sizes = [8, 32], strides = [1, 1]} : vector<8x128xf32> to vector<8x32xf32>
    %148 = vector.extract_strided_slice %145 {offsets = [0, 64], sizes = [8, 32], strides = [1, 1]} : vector<8x128xf32> to vector<8x32xf32>
    %149 = vector.extract_strided_slice %145 {offsets = [0, 96], sizes = [8, 32], strides = [1, 1]} : vector<8x128xf32> to vector<8x32xf32>
    %150 = arith.mulf %147, %116 : vector<8x32xf32>
    %151 = arith.mulf %146, %148 : vector<8x32xf32>
    %152 = arith.addf %150, %151 : vector<8x32xf32>
    %153 = math.tanh %152 : vector<8x32xf32>
    %154 = arith.mulf %149, %153 : vector<8x32xf32>
    %155 = arith.truncf %154 : vector<8x32xf32> to vector<8x32xbf16>
    %cst_32 = arith.constant dense<0.000000e+00> : vector<8x128xf32>
    %156 = tpu.matmul %155, %2, %cst_32 {dimension_numbers = #tpu.dot_dimension_numbers<[1], [0], [0], [1], [0, 0, 1, 1], [], []>} : vector<8x32xbf16>, vector<32x128xbf16>, vector<8x128xf32> -> vector<8x128xf32>
    %157 = arith.addf %139, %156 : vector<8x128xf32>
    %158 = arith.mulf %157, %19 : vector<8x128xf32>
    %159 = math.tanh %158 : vector<8x128xf32>
    %160 = arith.mulf %159, %19 : vector<8x128xf32>
    %161 = arith.addf %160, %22 : vector<8x128xf32>
    %162 = vector.extract_strided_slice %161 {offsets = [0, 0], sizes = [8, 32], strides = [1, 1]} : vector<8x128xf32> to vector<8x32xf32>
    %163 = vector.extract_strided_slice %161 {offsets = [0, 32], sizes = [8, 32], strides = [1, 1]} : vector<8x128xf32> to vector<8x32xf32>
    %164 = vector.extract_strided_slice %161 {offsets = [0, 64], sizes = [8, 32], strides = [1, 1]} : vector<8x128xf32> to vector<8x32xf32>
    %165 = vector.extract_strided_slice %161 {offsets = [0, 96], sizes = [8, 32], strides = [1, 1]} : vector<8x128xf32> to vector<8x32xf32>
    %166 = arith.mulf %163, %132 : vector<8x32xf32>
    %167 = arith.mulf %162, %164 : vector<8x32xf32>
    %168 = arith.addf %166, %167 : vector<8x32xf32>
    %169 = math.tanh %168 : vector<8x32xf32>
    %170 = arith.mulf %165, %169 : vector<8x32xf32>
    %171 = arith.truncf %154 : vector<8x32xf32> to vector<8x32xbf16>
    %cst_33 = arith.constant dense<0.000000e+00> : vector<8x128xf32>
    %172 = tpu.matmul %171, %0, %cst_33 {dimension_numbers = #tpu.dot_dimension_numbers<[1], [0], [0], [1], [0, 0, 1, 1], [], []>} : vector<8x32xbf16>, vector<32x128xbf16>, vector<8x128xf32> -> vector<8x128xf32>
    %173 = arith.truncf %170 : vector<8x32xf32> to vector<8x32xbf16>
    %cst_34 = arith.constant dense<0.000000e+00> : vector<8x128xf32>
    %174 = tpu.matmul %173, %1, %cst_34 {dimension_numbers = #tpu.dot_dimension_numbers<[1], [0], [0], [1], [0, 0, 1, 1], [], []>} : vector<8x32xbf16>, vector<32x128xbf16>, vector<8x128xf32> -> vector<8x128xf32>
    %175 = arith.addf %174, %5 : vector<8x128xf32>
    %176 = vector.extract_strided_slice %10 {offsets = [32, 0], sizes = [8, 128], strides = [1, 1]} : vector<64x128xf32> to vector<8x128xf32>
    %177 = arith.addf %176, %172 : vector<8x128xf32>
    %178 = arith.mulf %177, %19 : vector<8x128xf32>
    %179 = math.tanh %178 : vector<8x128xf32>
    %180 = arith.mulf %179, %19 : vector<8x128xf32>
    %181 = arith.addf %180, %22 : vector<8x128xf32>
    %182 = vector.extract_strided_slice %181 {offsets = [0, 0], sizes = [8, 32], strides = [1, 1]} : vector<8x128xf32> to vector<8x32xf32>
    %183 = vector.extract_strided_slice %181 {offsets = [0, 32], sizes = [8, 32], strides = [1, 1]} : vector<8x128xf32> to vector<8x32xf32>
    %184 = vector.extract_strided_slice %181 {offsets = [0, 64], sizes = [8, 32], strides = [1, 1]} : vector<8x128xf32> to vector<8x32xf32>
    %185 = vector.extract_strided_slice %181 {offsets = [0, 96], sizes = [8, 32], strides = [1, 1]} : vector<8x128xf32> to vector<8x32xf32>
    %186 = arith.mulf %183, %152 : vector<8x32xf32>
    %187 = arith.mulf %182, %184 : vector<8x32xf32>
    %188 = arith.addf %186, %187 : vector<8x32xf32>
    %189 = math.tanh %188 : vector<8x32xf32>
    %190 = arith.mulf %185, %189 : vector<8x32xf32>
    %191 = arith.truncf %190 : vector<8x32xf32> to vector<8x32xbf16>
    %cst_35 = arith.constant dense<0.000000e+00> : vector<8x128xf32>
    %192 = tpu.matmul %191, %2, %cst_35 {dimension_numbers = #tpu.dot_dimension_numbers<[1], [0], [0], [1], [0, 0, 1, 1], [], []>} : vector<8x32xbf16>, vector<32x128xbf16>, vector<8x128xf32> -> vector<8x128xf32>
    %193 = arith.addf %175, %192 : vector<8x128xf32>
    %194 = arith.mulf %193, %19 : vector<8x128xf32>
    %195 = math.tanh %194 : vector<8x128xf32>
    %196 = arith.mulf %195, %19 : vector<8x128xf32>
    %197 = arith.addf %196, %22 : vector<8x128xf32>
    %198 = vector.extract_strided_slice %197 {offsets = [0, 0], sizes = [8, 32], strides = [1, 1]} : vector<8x128xf32> to vector<8x32xf32>
    %199 = vector.extract_strided_slice %197 {offsets = [0, 32], sizes = [8, 32], strides = [1, 1]} : vector<8x128xf32> to vector<8x32xf32>
    %200 = vector.extract_strided_slice %197 {offsets = [0, 64], sizes = [8, 32], strides = [1, 1]} : vector<8x128xf32> to vector<8x32xf32>
    %201 = vector.extract_strided_slice %197 {offsets = [0, 96], sizes = [8, 32], strides = [1, 1]} : vector<8x128xf32> to vector<8x32xf32>
    %202 = arith.mulf %199, %168 : vector<8x32xf32>
    %203 = arith.mulf %198, %200 : vector<8x32xf32>
    %204 = arith.addf %202, %203 : vector<8x32xf32>
    %205 = math.tanh %204 : vector<8x32xf32>
    %206 = arith.mulf %201, %205 : vector<8x32xf32>
    %207 = arith.truncf %190 : vector<8x32xf32> to vector<8x32xbf16>
    %cst_36 = arith.constant dense<0.000000e+00> : vector<8x128xf32>
    %208 = tpu.matmul %207, %0, %cst_36 {dimension_numbers = #tpu.dot_dimension_numbers<[1], [0], [0], [1], [0, 0, 1, 1], [], []>} : vector<8x32xbf16>, vector<32x128xbf16>, vector<8x128xf32> -> vector<8x128xf32>
    %209 = arith.truncf %206 : vector<8x32xf32> to vector<8x32xbf16>
    %cst_37 = arith.constant dense<0.000000e+00> : vector<8x128xf32>
    %210 = tpu.matmul %209, %1, %cst_37 {dimension_numbers = #tpu.dot_dimension_numbers<[1], [0], [0], [1], [0, 0, 1, 1], [], []>} : vector<8x32xbf16>, vector<32x128xbf16>, vector<8x128xf32> -> vector<8x128xf32>
    %211 = arith.addf %210, %5 : vector<8x128xf32>
    %212 = vector.extract_strided_slice %10 {offsets = [40, 0], sizes = [8, 128], strides = [1, 1]} : vector<64x128xf32> to vector<8x128xf32>
    %213 = arith.addf %212, %208 : vector<8x128xf32>
    %214 = arith.mulf %213, %19 : vector<8x128xf32>
    %215 = math.tanh %214 : vector<8x128xf32>
    %216 = arith.mulf %215, %19 : vector<8x128xf32>
    %217 = arith.addf %216, %22 : vector<8x128xf32>
    %218 = vector.extract_strided_slice %217 {offsets = [0, 0], sizes = [8, 32], strides = [1, 1]} : vector<8x128xf32> to vector<8x32xf32>
    %219 = vector.extract_strided_slice %217 {offsets = [0, 32], sizes = [8, 32], strides = [1, 1]} : vector<8x128xf32> to vector<8x32xf32>
    %220 = vector.extract_strided_slice %217 {offsets = [0, 64], sizes = [8, 32], strides = [1, 1]} : vector<8x128xf32> to vector<8x32xf32>
    %221 = vector.extract_strided_slice %217 {offsets = [0, 96], sizes = [8, 32], strides = [1, 1]} : vector<8x128xf32> to vector<8x32xf32>
    %222 = arith.mulf %219, %188 : vector<8x32xf32>
    %223 = arith.mulf %218, %220 : vector<8x32xf32>
    %224 = arith.addf %222, %223 : vector<8x32xf32>
    %225 = math.tanh %224 : vector<8x32xf32>
    %226 = arith.mulf %221, %225 : vector<8x32xf32>
    %227 = arith.truncf %226 : vector<8x32xf32> to vector<8x32xbf16>
    %cst_38 = arith.constant dense<0.000000e+00> : vector<8x128xf32>
    %228 = tpu.matmul %227, %2, %cst_38 {dimension_numbers = #tpu.dot_dimension_numbers<[1], [0], [0], [1], [0, 0, 1, 1], [], []>} : vector<8x32xbf16>, vector<32x128xbf16>, vector<8x128xf32> -> vector<8x128xf32>
    %229 = arith.addf %211, %228 : vector<8x128xf32>
    %230 = arith.mulf %229, %19 : vector<8x128xf32>
    %231 = math.tanh %230 : vector<8x128xf32>
    %232 = arith.mulf %231, %19 : vector<8x128xf32>
    %233 = arith.addf %232, %22 : vector<8x128xf32>
    %234 = vector.extract_strided_slice %233 {offsets = [0, 0], sizes = [8, 32], strides = [1, 1]} : vector<8x128xf32> to vector<8x32xf32>
    %235 = vector.extract_strided_slice %233 {offsets = [0, 32], sizes = [8, 32], strides = [1, 1]} : vector<8x128xf32> to vector<8x32xf32>
    %236 = vector.extract_strided_slice %233 {offsets = [0, 64], sizes = [8, 32], strides = [1, 1]} : vector<8x128xf32> to vector<8x32xf32>
    %237 = vector.extract_strided_slice %233 {offsets = [0, 96], sizes = [8, 32], strides = [1, 1]} : vector<8x128xf32> to vector<8x32xf32>
    %238 = arith.mulf %235, %204 : vector<8x32xf32>
    %239 = arith.mulf %234, %236 : vector<8x32xf32>
    %240 = arith.addf %238, %239 : vector<8x32xf32>
    %241 = math.tanh %240 : vector<8x32xf32>
    %242 = arith.mulf %237, %241 : vector<8x32xf32>
    %243 = arith.truncf %226 : vector<8x32xf32> to vector<8x32xbf16>
    %cst_39 = arith.constant dense<0.000000e+00> : vector<8x128xf32>
    %244 = tpu.matmul %243, %0, %cst_39 {dimension_numbers = #tpu.dot_dimension_numbers<[1], [0], [0], [1], [0, 0, 1, 1], [], []>} : vector<8x32xbf16>, vector<32x128xbf16>, vector<8x128xf32> -> vector<8x128xf32>
    %245 = arith.truncf %242 : vector<8x32xf32> to vector<8x32xbf16>
    %cst_40 = arith.constant dense<0.000000e+00> : vector<8x128xf32>
    %246 = tpu.matmul %245, %1, %cst_40 {dimension_numbers = #tpu.dot_dimension_numbers<[1], [0], [0], [1], [0, 0, 1, 1], [], []>} : vector<8x32xbf16>, vector<32x128xbf16>, vector<8x128xf32> -> vector<8x128xf32>
    %247 = arith.addf %246, %5 : vector<8x128xf32>
    %248 = vector.extract_strided_slice %10 {offsets = [48, 0], sizes = [8, 128], strides = [1, 1]} : vector<64x128xf32> to vector<8x128xf32>
    %249 = arith.addf %248, %244 : vector<8x128xf32>
    %250 = arith.mulf %249, %19 : vector<8x128xf32>
    %251 = math.tanh %250 : vector<8x128xf32>
    %252 = arith.mulf %251, %19 : vector<8x128xf32>
    %253 = arith.addf %252, %22 : vector<8x128xf32>
    %254 = vector.extract_strided_slice %253 {offsets = [0, 0], sizes = [8, 32], strides = [1, 1]} : vector<8x128xf32> to vector<8x32xf32>
    %255 = vector.extract_strided_slice %253 {offsets = [0, 32], sizes = [8, 32], strides = [1, 1]} : vector<8x128xf32> to vector<8x32xf32>
    %256 = vector.extract_strided_slice %253 {offsets = [0, 64], sizes = [8, 32], strides = [1, 1]} : vector<8x128xf32> to vector<8x32xf32>
    %257 = vector.extract_strided_slice %253 {offsets = [0, 96], sizes = [8, 32], strides = [1, 1]} : vector<8x128xf32> to vector<8x32xf32>
    %258 = arith.mulf %255, %224 : vector<8x32xf32>
    %259 = arith.mulf %254, %256 : vector<8x32xf32>
    %260 = arith.addf %258, %259 : vector<8x32xf32>
    %261 = math.tanh %260 : vector<8x32xf32>
    %262 = arith.mulf %257, %261 : vector<8x32xf32>
    %263 = arith.truncf %262 : vector<8x32xf32> to vector<8x32xbf16>
    %cst_41 = arith.constant dense<0.000000e+00> : vector<8x128xf32>
    %264 = tpu.matmul %263, %2, %cst_41 {dimension_numbers = #tpu.dot_dimension_numbers<[1], [0], [0], [1], [0, 0, 1, 1], [], []>} : vector<8x32xbf16>, vector<32x128xbf16>, vector<8x128xf32> -> vector<8x128xf32>
    %265 = arith.addf %247, %264 : vector<8x128xf32>
    %266 = arith.mulf %265, %19 : vector<8x128xf32>
    %267 = math.tanh %266 : vector<8x128xf32>
    %268 = arith.mulf %267, %19 : vector<8x128xf32>
    %269 = arith.addf %268, %22 : vector<8x128xf32>
    %270 = vector.extract_strided_slice %269 {offsets = [0, 0], sizes = [8, 32], strides = [1, 1]} : vector<8x128xf32> to vector<8x32xf32>
    %271 = vector.extract_strided_slice %269 {offsets = [0, 32], sizes = [8, 32], strides = [1, 1]} : vector<8x128xf32> to vector<8x32xf32>
    %272 = vector.extract_strided_slice %269 {offsets = [0, 64], sizes = [8, 32], strides = [1, 1]} : vector<8x128xf32> to vector<8x32xf32>
    %273 = vector.extract_strided_slice %269 {offsets = [0, 96], sizes = [8, 32], strides = [1, 1]} : vector<8x128xf32> to vector<8x32xf32>
    %274 = arith.mulf %271, %240 : vector<8x32xf32>
    %275 = arith.mulf %270, %272 : vector<8x32xf32>
    %276 = arith.addf %274, %275 : vector<8x32xf32>
    %277 = math.tanh %276 : vector<8x32xf32>
    %278 = arith.mulf %273, %277 : vector<8x32xf32>
    %279 = arith.truncf %262 : vector<8x32xf32> to vector<8x32xbf16>
    %cst_42 = arith.constant dense<0.000000e+00> : vector<8x128xf32>
    %280 = tpu.matmul %279, %0, %cst_42 {dimension_numbers = #tpu.dot_dimension_numbers<[1], [0], [0], [1], [0, 0, 1, 1], [], []>} : vector<8x32xbf16>, vector<32x128xbf16>, vector<8x128xf32> -> vector<8x128xf32>
    %281 = arith.truncf %278 : vector<8x32xf32> to vector<8x32xbf16>
    %cst_43 = arith.constant dense<0.000000e+00> : vector<8x128xf32>
    %282 = tpu.matmul %281, %1, %cst_43 {dimension_numbers = #tpu.dot_dimension_numbers<[1], [0], [0], [1], [0, 0, 1, 1], [], []>} : vector<8x32xbf16>, vector<32x128xbf16>, vector<8x128xf32> -> vector<8x128xf32>
    %283 = arith.addf %282, %5 : vector<8x128xf32>
    %284 = vector.extract_strided_slice %10 {offsets = [56, 0], sizes = [8, 128], strides = [1, 1]} : vector<64x128xf32> to vector<8x128xf32>
    %285 = arith.addf %284, %280 : vector<8x128xf32>
    %286 = arith.mulf %285, %19 : vector<8x128xf32>
    %287 = math.tanh %286 : vector<8x128xf32>
    %288 = arith.mulf %287, %19 : vector<8x128xf32>
    %289 = arith.addf %288, %22 : vector<8x128xf32>
    %290 = vector.extract_strided_slice %289 {offsets = [0, 0], sizes = [8, 32], strides = [1, 1]} : vector<8x128xf32> to vector<8x32xf32>
    %291 = vector.extract_strided_slice %289 {offsets = [0, 32], sizes = [8, 32], strides = [1, 1]} : vector<8x128xf32> to vector<8x32xf32>
    %292 = vector.extract_strided_slice %289 {offsets = [0, 64], sizes = [8, 32], strides = [1, 1]} : vector<8x128xf32> to vector<8x32xf32>
    %293 = vector.extract_strided_slice %289 {offsets = [0, 96], sizes = [8, 32], strides = [1, 1]} : vector<8x128xf32> to vector<8x32xf32>
    %294 = arith.mulf %291, %260 : vector<8x32xf32>
    %295 = arith.mulf %290, %292 : vector<8x32xf32>
    %296 = arith.addf %294, %295 : vector<8x32xf32>
    %297 = math.tanh %296 : vector<8x32xf32>
    %298 = arith.mulf %293, %297 : vector<8x32xf32>
    %299 = arith.truncf %298 : vector<8x32xf32> to vector<8x32xbf16>
    %cst_44 = arith.constant dense<0.000000e+00> : vector<8x128xf32>
    %300 = tpu.matmul %299, %2, %cst_44 {dimension_numbers = #tpu.dot_dimension_numbers<[1], [0], [0], [1], [0, 0, 1, 1], [], []>} : vector<8x32xbf16>, vector<32x128xbf16>, vector<8x128xf32> -> vector<8x128xf32>
    %301 = arith.addf %283, %300 : vector<8x128xf32>
    %302 = arith.mulf %301, %19 : vector<8x128xf32>
    %303 = math.tanh %302 : vector<8x128xf32>
    %304 = arith.mulf %303, %19 : vector<8x128xf32>
    %305 = arith.addf %304, %22 : vector<8x128xf32>
    %306 = vector.extract_strided_slice %305 {offsets = [0, 0], sizes = [8, 32], strides = [1, 1]} : vector<8x128xf32> to vector<8x32xf32>
    %307 = vector.extract_strided_slice %305 {offsets = [0, 32], sizes = [8, 32], strides = [1, 1]} : vector<8x128xf32> to vector<8x32xf32>
    %308 = vector.extract_strided_slice %305 {offsets = [0, 64], sizes = [8, 32], strides = [1, 1]} : vector<8x128xf32> to vector<8x32xf32>
    %309 = vector.extract_strided_slice %305 {offsets = [0, 96], sizes = [8, 32], strides = [1, 1]} : vector<8x128xf32> to vector<8x32xf32>
    %310 = arith.mulf %307, %276 : vector<8x32xf32>
    %311 = arith.mulf %306, %308 : vector<8x32xf32>
    %312 = arith.addf %310, %311 : vector<8x32xf32>
    %313 = math.tanh %312 : vector<8x32xf32>
    %314 = arith.mulf %309, %313 : vector<8x32xf32>
    %315 = arith.truncf %314 : vector<8x32xf32> to vector<8x32xbf16>
    %c0_45 = arith.constant 0 : index
    %c0_46 = arith.constant 0 : index
    %316 = vector.load %arg7[%c0_45, %c0_46] : memref<32x128xbf16, #tpu.memory_space<vmem>>, vector<32x128xbf16>
    %cst_47 = arith.constant dense<0.000000e+00> : vector<8x128xf32>
    %317 = tpu.matmul %315, %316, %cst_47 {dimension_numbers = #tpu.dot_dimension_numbers<[1], [0], [0], [1], [0, 0, 1, 1], [], []>} : vector<8x32xbf16>, vector<32x128xbf16>, vector<8x128xf32> -> vector<8x128xf32>
    %c0_48 = arith.constant 0 : index
    %c0_49 = arith.constant 0 : index
    %318 = vector.load %arg8[%c0_48, %c0_49] : memref<1x128xf32, #tpu.memory_space<vmem>>, vector<1x128xf32>
    %319 = vector.broadcast %318 : vector<1x128xf32> to vector<8x128xf32>
    %320 = arith.addf %317, %319 : vector<8x128xf32>
    %c0_50 = arith.constant 0 : index
    %c0_51 = arith.constant 0 : index
    %321 = vector.load %arg9[%c0_50, %c0_51] : memref<8x128xf32, #tpu.memory_space<vmem>>, vector<8x128xf32>
    tpu.vector_store %arg9[%c0_50, %c0_51], %320 {strides = array<i32>} : memref<8x128xf32, #tpu.memory_space<vmem>>, vector<8x128xf32>,
    return
  }
}

</mosaic_0001>

<llo_original>
// kernel: tpu_custom_call.1
$region0: #{tpu_custom_call.1}
  #allocation0 [shape = 'u32[]', space=smem, size = 0x4, offset = 0x4, fixed_abs, tag = 'smem constant byte address 0x4 - core index']
  #allocation1 [shape = 'u32[144,128]{1,0:T(1,128)}', space=vmem, size = 0x12000, scoped, tag = 'internal scratch']
  %s0 = inlined_call_operand.vmem [shape: bf16[64,8], index: 0, kind: input, shape index: {}]
  %s1 = inlined_call_operand.hbm [shape: f32[64,128], index: 1, kind: input, shape index: {}]
  %s2 = inlined_call_operand.hbm [shape: bf16[8,128], index: 2, kind: input, shape index: {}]
  %s3 = inlined_call_operand.vmem [shape: bf16[32,128], index: 3, kind: input, shape index: {}]
  %s4 = inlined_call_operand.vmem [shape: bf16[32,128], index: 4, kind: input, shape index: {}]
  %s5 = inlined_call_operand.vmem [shape: bf16[32,128], index: 5, kind: input, shape index: {}]
  %s6 = inlined_call_operand.vmem [shape: f32[1,128], index: 6, kind: input, shape index: {}]
  %s7 = inlined_call_operand.hbm [shape: bf16[32,128], index: 7, kind: input, shape index: {}]
  %s8 = inlined_call_operand.vmem [shape: f32[1,128], index: 8, kind: input, shape index: {}]
  %s9 = inlined_call_operand.hbm [shape: f32[8,128], index: 9, kind: output, shape index: {}]
  %s10 = sld [smem:[#allocation0]]
  $region58: #{tpu_custom_call.1} parent=0
    _
  %s12 = ssub.s32 1, %s10
  %s13 = scalar_select 0, %s12, %s10
  $region1: #{tpu_custom_call.1} parent=0
    #allocation2 [shape = 'u8[32768]{0}', space=vmem, size = 0x8000, scoped, tag = 'input window, operand 1, single buffered']
    #allocation3 [shape = 's32[1]{0}', space=sflag, size = 0x4, scoped, tag = 'scoped memory for tpu_custom_call.1']
    #allocation4 [shape = 's32[1]{0}', space=sflag, size = 0x4, scoped, tag = 'scoped memory for tpu_custom_call.1']
    #allocation5 [shape = 'u8[2048]{0}', space=vmem, size = 0x800, scoped, tag = 'input window, operand 2, single buffered']
    #allocation6 [shape = 's32[1]{0}', space=sflag, size = 0x4, scoped, tag = 'scoped memory for tpu_custom_call.1']
    #allocation7 [shape = 'u8[8192]{0}', space=vmem, size = 0x2000, scoped, tag = 'input window, operand 7, single buffered']
    #allocation8 [shape = 'u8[4096]{0}', space=vmem, size = 0x1000, scoped, tag = 'output window, operand 0, single buffered']
    %14 = vsyncpa [#allocation3], 0
    %15 = vsyncpa [#allocation6], 0
    %16 = vsyncpa [#allocation4], 0
    // Predicated region
    $region2: #{tpu_custom_call.1} parent=1 // pred_check
      _
    $region3: #{tpu_custom_call.1} parent=1 // pred_check_branch
      %18 = sbr.rel (0) target = $region5
    $region4: #{tpu_custom_call.1} parent=1 // pred_region
      _
    $region5: #{tpu_custom_call.1} parent=1 // pred_fallthru
      _
    // Predicated region
    $region6: #{tpu_custom_call.1} parent=1 // pred_check
      _
    $region7: #{tpu_custom_call.1} parent=1 // pred_check_branch
      %20 = sbr.rel (0) target = $region9
    $region8: #{tpu_custom_call.1} parent=1 // pred_region
      %s22 = ssub.s32 1024, 1024
      %23 = vsyncadd [#allocation3], %s22
      %s24 = sshll.u32 [#allocation2], 4
      %s25 = int_to_ptr.vmem [resolvable:$true] %s24
      %30 = dma.hbm_to_vmem [thread:$0]  %s1, 1024, %s25, [#allocation3], 128, 128, 8
    $region9: #{tpu_custom_call.1} parent=1 // pred_fallthru
      _
    // Predicated region
    $region10: #{tpu_custom_call.1} parent=1 // pred_check
      _
    $region11: #{tpu_custom_call.1} parent=1 // pred_check_branch
      %32 = sbr.rel (0) target = $region13
    $region12: #{tpu_custom_call.1} parent=1 // pred_region
      %s34 = ssub.s32 64, 64
      %35 = vsyncadd [#allocation6], %s34
      %s37 = sshll.u32 [#allocation5], 4
      %s38 = int_to_ptr.vmem [resolvable:$true] %s37
      %40 = dma.hbm_to_vmem [thread:$0]  %s2, 64, %s38, [#allocation6]
    $region13: #{tpu_custom_call.1} parent=1 // pred_fallthru
      _
    // Predicated region
    $region14: #{tpu_custom_call.1} parent=1 // pred_check
      _
    $region15: #{tpu_custom_call.1} parent=1 // pred_check_branch
      %42 = sbr.rel (0) target = $region17
    $region16: #{tpu_custom_call.1} parent=1 // pred_region
      _
    $region17: #{tpu_custom_call.1} parent=1 // pred_fallthru
      _
    // Predicated region
    $region18: #{tpu_custom_call.1} parent=1 // pred_check
      _
    $region19: #{tpu_custom_call.1} parent=1 // pred_check_branch
      %44 = sbr.rel (0) target = $region21
    $region20: #{tpu_custom_call.1} parent=1 // pred_region
      _
    $region21: #{tpu_custom_call.1} parent=1 // pred_fallthru
      _
    // Predicated region
    $region22: #{tpu_custom_call.1} parent=1 // pred_check
      _
    $region23: #{tpu_custom_call.1} parent=1 // pred_check_branch
      %46 = sbr.rel (0) target = $region25
    $region24: #{tpu_custom_call.1} parent=1 // pred_region
      _
    $region25: #{tpu_custom_call.1} parent=1 // pred_fallthru
      _
    // Predicated region
    $region26: #{tpu_custom_call.1} parent=1 // pred_check
      _
    $region27: #{tpu_custom_call.1} parent=1 // pred_check_branch
      %48 = sbr.rel (0) target = $region29
    $region28: #{tpu_custom_call.1} parent=1 // pred_region
      _
    $region29: #{tpu_custom_call.1} parent=1 // pred_fallthru
      _
    // Predicated region
    $region30: #{tpu_custom_call.1} parent=1 // pred_check
      _
    $region31: #{tpu_custom_call.1} parent=1 // pred_check_branch
      %50 = sbr.rel (0) target = $region33
    $region32: #{tpu_custom_call.1} parent=1 // pred_region
      %s52 = ssub.s32 256, 256
      %53 = vsyncadd [#allocation6], %s52
      %s54 = sshll.u32 [#allocation7], 4
      %s55 = int_to_ptr.vmem [resolvable:$true] %s54
      %60 = dma.hbm_to_vmem [thread:$0]  %s7, 256, %s55, [#allocation6], 64, 64, 4
    $region33: #{tpu_custom_call.1} parent=1 // pred_fallthru
      _
    // Predicated region
    $region34: #{tpu_custom_call.1} parent=1 // pred_check
      _
    $region35: #{tpu_custom_call.1} parent=1 // pred_check_branch
      %62 = sbr.rel (0) target = $region37
    $region36: #{tpu_custom_call.1} parent=1 // pred_region
      _
    $region37: #{tpu_custom_call.1} parent=1 // pred_fallthru
      _
    // Predicated region
    $region38: #{tpu_custom_call.1} parent=1 // pred_check
      _
    $region39: #{tpu_custom_call.1} parent=1 // pred_check_branch
      %64 = sbr.rel (0) target = $region41
    $region40: #{tpu_custom_call.1} parent=1 // pred_region
      %65 = dma.done [#allocation3], 1024
    $region41: #{tpu_custom_call.1} parent=1 // pred_fallthru
      _
    // Predicated region
    $region42: #{tpu_custom_call.1} parent=1 // pred_check
      _
    $region43: #{tpu_custom_call.1} parent=1 // pred_check_branch
      %67 = sbr.rel (0) target = $region45
    $region44: #{tpu_custom_call.1} parent=1 // pred_region
      %68 = dma.done [#allocation6], 64
    $region45: #{tpu_custom_call.1} parent=1 // pred_fallthru
      _
    // Predicated region
    $region46: #{tpu_custom_call.1} parent=1 // pred_check
      _
    $region47: #{tpu_custom_call.1} parent=1 // pred_check_branch
      %70 = sbr.rel (0) target = $region49
    $region48: #{tpu_custom_call.1} parent=1 // pred_region
      %71 = dma.done [#allocation6], 256
    $region49: #{tpu_custom_call.1} parent=1 // pred_fallthru
      _
    %v73 = vld [vmem:[%s3] sm:$0xf]
    %v74 = vld [vmem:[%s3 + $0x4] sm:$0xf]
    %v75 = vld [vmem:[%s3 + $0x8] sm:$0xf]
    %v76 = vld [vmem:[%s3 + $0xc] sm:$0xf]
    %v77 = vld [vmem:[%s5] sm:$0xf]
    %v78 = vld [vmem:[%s5 + $0x4] sm:$0xf]
    %v79 = vld [vmem:[%s5 + $0x8] sm:$0xf]
    %v80 = vld [vmem:[%s5 + $0xc] sm:$0xf]
    %v81 = vld [vmem:[%s4] sm:$0xf]
    %v82 = vld [vmem:[%s4 + $0x4] sm:$0xf]
    %v83 = vld [vmem:[%s4 + $0x8] sm:$0xf]
    %v84 = vld [vmem:[%s4 + $0xc] sm:$0xf]
    %v85 = vld [vmem:[%s6] sm:$0x1]
    %v87 = vlaneseq
    %v88 = vshrl.u32 %v87, 7
    %v89 = vsub.s32 0, %v88
    %v90 = vrot.slane %v85, %v89
    %v92 = vld [vmem:[%s0] sm:$0xf]
    %v93 = vld [vmem:[%s0 + $0x4] sm:$0xf]
    %v94 = vld [vmem:[%s0 + $0x8] sm:$0xf]
    %v95 = vld [vmem:[%s0 + $0xc] sm:$0xf]
    %v96 = vld [vmem:[%s0 + $0x10] sm:$0xf]
    %v97 = vld [vmem:[%s0 + $0x14] sm:$0xf]
    %v98 = vld [vmem:[%s0 + $0x18] sm:$0xf]
    %v99 = vld [vmem:[%s0 + $0x1c] sm:$0xf]
    %v100 = vld [vmem:[#allocation5] sm:$0xf]
    %v101 = vld [vmem:[#allocation2] sm:$0xff]
    %v102 = vld [vmem:[#allocation2 + $0x8] sm:$0xff]
    %v103 = vld [vmem:[#allocation2 + $0x10] sm:$0xff]
    %v104 = vld [vmem:[#allocation2 + $0x18] sm:$0xff]
    %v105 = vld [vmem:[#allocation2 + $0x20] sm:$0xff]
    %v106 = vld [vmem:[#allocation2 + $0x28] sm:$0xff]
    %v107 = vld [vmem:[#allocation2 + $0x30] sm:$0xff]
    %v108 = vld [vmem:[#allocation2 + $0x38] sm:$0xff]
    %v117 = vunpack.c.l.b16 %v92
    %v118 = vunpack.c.l.b16 %v93
    %v119 = vunpack.c.l.b16 %v94
    %v120 = vunpack.c.l.b16 %v95
    %v121 = vunpack.c.l.b16 %v96
    %v122 = vunpack.c.l.b16 %v97
    %v123 = vunpack.c.l.b16 %v98
    %v124 = vunpack.c.l.b16 %v99
    %v125 = vpack.c.b16 %v118, %v117
    %v126 = vpack.c.b16 %v120, %v119
    %v127 = vpack.c.b16 %v122, %v121
    %v128 = vpack.c.b16 %v124, %v123
    %vm129 = vcmask 64512
    %v131 = vsel %vm129, %v125, 0
    %v134 = vsel %vm129, %v126, 0
    %v137 = vsel %vm129, %v127, 0
    %v140 = vsel %vm129, %v128, 0
    %vm142 = vcmask 1043456
    %v144 = vsel %vm142, %v100, 0
    %146 = vmatprep.subr.bf16.mxu0 0
    %147 = vmatpush1.bf16.msra.mxu0 %v144
    %148 = vmatprep.subr.bf16.mxu0 0
    %149 = vmatpush1.bf16.msra.mxu0 0
    %150 = vmatprep.subr.bf16.mxu0 0
    %151 = vmatpush1.bf16.msra.mxu0 0
    %152 = vmatprep.subr.bf16.mxu0 0
    %153 = vmatpush1.bf16.msra.mxu0 0
    %154 = vmatprep.subr.bf16.mxu0 0
    %155 = vmatpush1.bf16.msra.mxu0 0
    %156 = vmatprep.subr.bf16.mxu0 0
    %157 = vmatpush1.bf16.msra.mxu0 0
    %158 = vmatprep.subr.bf16.mxu0 0
    %159 = vmatpush1.bf16.msra.mxu0 0
    %160 = vmatprep.subr.bf16.mxu0 0
    %161 = vmatpush1.bf16.msra.mxu0 0
    %162 = vmatprep.subr.bf16.mxu0 0
    %163 = vmatpush1.bf16.msra.mxu0 0
    %164 = vmatprep.subr.bf16.mxu0 0
    %165 = vmatpush1.bf16.msra.mxu0 0
    %166 = vmatprep.subr.bf16.mxu0 0
    %167 = vmatpush1.bf16.msra.mxu0 0
    %168 = vmatprep.subr.bf16.mxu0 0
    %169 = vmatpush1.bf16.msra.mxu0 0
    %170 = vmatprep.subr.bf16.mxu0 0
    %171 = vmatpush1.bf16.msra.mxu0 0
    %172 = vmatprep.subr.bf16.mxu0 0
    %173 = vmatpush1.bf16.msra.mxu0 0
    %174 = vmatprep.subr.bf16.mxu0 0
    %175 = vmatpush1.bf16.msra.mxu0 0
    %176 = vmatprep.subr.bf16.mxu0 0
    %177 = vmatpush1.bf16.msra.mxu0 0
    %178 = vmatprep.mubr.bf16.mxu0 0
    %179 = vmatmul.mubr.bf16.gmra.mrb[0].mxu0 %v131
    %v180 = vpop.f32.mrb[0].mxu0
    %v181 = vadd.f32 %v101, %v180
    %v182 = vpop.f32.mrb[0].mxu0
    %v183 = vpop.f32.mrb[0].mxu0
    %v184 = vadd.f32 %v102, %v183
    %v185 = vpop.f32.mrb[0].mxu0
    %186 = vmatprep.mubr.bf16.mxu0 0
    %187 = vmatmul.mubr.bf16.gmra.mrb[0].mxu0 %v134
    %v188 = vpop.f32.mrb[0].mxu0
    %v189 = vadd.f32 %v103, %v188
    %v190 = vpop.f32.mrb[0].mxu0
    %v191 = vpop.f32.mrb[0].mxu0
    %v192 = vadd.f32 %v104, %v191
    %v193 = vpop.f32.mrb[0].mxu0
    %194 = vmatprep.mubr.bf16.mxu0 0
    %195 = vmatmul.mubr.bf16.gmra.mrb[0].mxu0 %v137
    %v196 = vpop.f32.mrb[0].mxu0
    %v197 = vadd.f32 %v105, %v196
    %v198 = vpop.f32.mrb[0].mxu0
    %v199 = vpop.f32.mrb[0].mxu0
    %v200 = vadd.f32 %v106, %v199
    %v201 = vpop.f32.mrb[0].mxu0
    %202 = vmatprep.mubr.bf16.mxu0 0
    %203 = vmatmul.mubr.bf16.gmra.mrb[0].mxu0 %v140
    %v204 = vpop.f32.mrb[0].mxu0
    %v205 = vadd.f32 %v107, %v204
    %v206 = vpop.f32.mrb[0].mxu0
    %v207 = vpop.f32.mrb[0].mxu0
    %v208 = vadd.f32 %v108, %v207
    %v209 = vpop.f32.mrb[0].mxu0
    %210 = vdwg.mxu0
    %v211 = vlaneseq
    %v212 = vand.u32 %v211, 127
    %vm213 = vcmp.ge.s32.totalorder %v212, 64
    %vm214 = vcmp.lt.s32.totalorder %v212, 96
    %vm215 = vmand %vm213, %vm214
    %v216 = vsel %vm215, 1.0, 0.5
    %v217 = vsel %vm215, 0.0, 0.5
    %v222 = vunpack.c.l.b16 %v73
    %v223 = vunpack.c.l.b16 %v74
    %v224 = vunpack.c.l.b16 %v75
    %v225 = vunpack.c.l.b16 %v76
    %v226 = vpack.c.b16 %v223, %v222
    %v227 = vpack.c.b16 %v225, %v224
    %vm230 = vcmask 261120
    %v232 = vsel %vm230, 0, 0
    %234 = vmatprep.subr.bf16.mxu0 0
    %235 = vmatpush1.bf16.msra.mxu0 %v226
    %236 = vmatprep.subr.bf16.mxu0 0
    %237 = vmatpush1.bf16.msra.mxu0 %v227
    %238 = vmatprep.subr.bf16.mxu0 0
    %239 = vmatpush1.bf16.msra.mxu0 0
    %240 = vmatprep.subr.bf16.mxu0 0
    %241 = vmatpush1.bf16.msra.mxu0 0
    %242 = vmatprep.subr.bf16.mxu0 0
    %243 = vmatpush1.bf16.msra.mxu0 0
    %244 = vmatprep.subr.bf16.mxu0 0
    %245 = vmatpush1.bf16.msra.mxu0 0
    %246 = vmatprep.subr.bf16.mxu0 0
    %247 = vmatpush1.bf16.msra.mxu0 0
    %248 = vmatprep.subr.bf16.mxu0 0
    %249 = vmatpush1.bf16.msra.mxu0 0
    %250 = vmatprep.subr.bf16.mxu0 0
    %251 = vmatpush1.bf16.msra.mxu0 0
    %252 = vmatprep.subr.bf16.mxu0 0
    %253 = vmatpush1.bf16.msra.mxu0 0
    %254 = vmatprep.subr.bf16.mxu0 0
    %255 = vmatpush1.bf16.msra.mxu0 0
    %256 = vmatprep.subr.bf16.mxu0 0
    %257 = vmatpush1.bf16.msra.mxu0 0
    %258 = vmatprep.subr.bf16.mxu0 0
    %259 = vmatpush1.bf16.msra.mxu0 0
    %260 = vmatprep.subr.bf16.mxu0 0
    %261 = vmatpush1.bf16.msra.mxu0 0
    %262 = vmatprep.subr.bf16.mxu0 0
    %263 = vmatpush1.bf16.msra.mxu0 0
    %264 = vmatprep.subr.bf16.mxu0 0
    %265 = vmatpush1.bf16.msra.mxu0 0
    %266 = vmatprep.mubr.bf16.mxu0 0
    %267 = vmatmul.mubr.bf16.gmra.mrb[0].mxu0 %v232
    %v268 = vpop.f32.mrb[0].mxu0
    %v269 = vadd.f32 0.0, %v268
    %v270 = vpop.f32.mrb[0].mxu0
    %v271 = vpop.f32.mrb[0].mxu0
    %v272 = vpop.f32.mrb[0].mxu0
    %273 = vdwg.mxu0
    %v278 = vunpack.c.l.b16 %v77
    %v279 = vunpack.c.l.b16 %v78
    %v280 = vunpack.c.l.b16 %v79
    %v281 = vunpack.c.l.b16 %v80
    %v282 = vpack.c.b16 %v279, %v278
    %v283 = vpack.c.b16 %v281, %v280
    %286 = vmatprep.subr.bf16.mxu0 0
    %287 = vmatpush1.bf16.msra.mxu0 %v282
    %288 = vmatprep.subr.bf16.mxu0 0
    %289 = vmatpush1.bf16.msra.mxu0 %v283
    %290 = vmatprep.subr.bf16.mxu0 0
    %291 = vmatpush1.bf16.msra.mxu0 0
    %292 = vmatprep.subr.bf16.mxu0 0
    %293 = vmatpush1.bf16.msra.mxu0 0
    %294 = vmatprep.subr.bf16.mxu0 0
    %295 = vmatpush1.bf16.msra.mxu0 0
    %296 = vmatprep.subr.bf16.mxu0 0
    %297 = vmatpush1.bf16.msra.mxu0 0
    %298 = vmatprep.subr.bf16.mxu0 0
    %299 = vmatpush1.bf16.msra.mxu0 0
    %300 = vmatprep.subr.bf16.mxu0 0
    %301 = vmatpush1.bf16.msra.mxu0 0
    %302 = vmatprep.subr.bf16.mxu0 0
    %303 = vmatpush1.bf16.msra.mxu0 0
    %304 = vmatprep.subr.bf16.mxu0 0
    %305 = vmatpush1.bf16.msra.mxu0 0
    %306 = vmatprep.subr.bf16.mxu0 0
    %307 = vmatpush1.bf16.msra.mxu0 0
    %308 = vmatprep.subr.bf16.mxu0 0
    %309 = vmatpush1.bf16.msra.mxu0 0
    %310 = vmatprep.subr.bf16.mxu0 0
    %311 = vmatpush1.bf16.msra.mxu0 0
    %312 = vmatprep.subr.bf16.mxu0 0
    %313 = vmatpush1.bf16.msra.mxu0 0
    %314 = vmatprep.subr.bf16.mxu0 0
    %315 = vmatpush1.bf16.msra.mxu0 0
    %316 = vmatprep.subr.bf16.mxu0 0
    %317 = vmatpush1.bf16.msra.mxu0 0
    %318 = vmatprep.mubr.bf16.mxu0 0
    %319 = vmatmul.mubr.bf16.gmra.mrb[0].mxu0 %v232
    %v320 = vpop.f32.mrb[0].mxu0
    %v321 = vadd.f32 %v90, %v320
    %v322 = vpop.f32.mrb[0].mxu0
    %v323 = vpop.f32.mrb[0].mxu0
    %v324 = vpop.f32.mrb[0].mxu0
    %325 = vdwg.mxu0
    %v326 = vadd.f32 %v181, %v269
    %v327 = vmul.f32 %v326, %v216
    %v328 = vtanh.pop %v327
    %v329 = vmul.f32 %v328, %v216
    %v330 = vadd.f32 %v329, %v217
    %v331 = vmul.f32 %v330, 0.0
    %333 = vrot.lane.b32.xlu0 %v330, 64
    %v334 = vpop.permute.xlu0 %333
    %v336 = vmul.f32 %v330, %v334
    %338 = vrot.lane.b32.xlu0 %v336, 32
    %v339 = vpop.permute.xlu0 %338
    %v341 = vadd.f32 %v331, %v339
    %v342 = vtanh.pop %v341
    %344 = vrot.lane.b32.xlu0 %v342, 64
    %v345 = vpop.permute.xlu0 %344
    %v347 = vmul.f32 %v330, %v345
    %v348 = vpack.c.bf16 %v347, %v347
    %350 = vrot.lane.b32.xlu0 %v348, 32
    %v351 = vpop.permute.xlu0 %350
    %v356 = vunpack.c.l.b16 %v81
    %v357 = vunpack.c.l.b16 %v82
    %v358 = vunpack.c.l.b16 %v83
    %v359 = vunpack.c.l.b16 %v84
    %v360 = vpack.c.b16 %v357, %v356
    %v361 = vpack.c.b16 %v359, %v358
    %v365 = vsel %vm230, %v351, 0
    %367 = vmatprep.subr.bf16.mxu0 0
    %368 = vmatpush1.bf16.msra.mxu0 %v360
    %369 = vmatprep.subr.bf16.mxu0 0
    %370 = vmatpush1.bf16.msra.mxu0 %v361
    %371 = vmatprep.subr.bf16.mxu0 0
    %372 = vmatpush1.bf16.msra.mxu0 0
    %373 = vmatprep.subr.bf16.mxu0 0
    %374 = vmatpush1.bf16.msra.mxu0 0
    %375 = vmatprep.subr.bf16.mxu0 0
    %376 = vmatpush1.bf16.msra.mxu0 0
    %377 = vmatprep.subr.bf16.mxu0 0
    %378 = vmatpush1.bf16.msra.mxu0 0
    %379 = vmatprep.subr.bf16.mxu0 0
    %380 = vmatpush1.bf16.msra.mxu0 0
    %381 = vmatprep.subr.bf16.mxu0 0
    %382 = vmatpush1.bf16.msra.mxu0 0
    %383 = vmatprep.subr.bf16.mxu0 0
    %384 = vmatpush1.bf16.msra.mxu0 0
    %385 = vmatprep.subr.bf16.mxu0 0
    %386 = vmatpush1.bf16.msra.mxu0 0
    %387 = vmatprep.subr.bf16.mxu0 0
    %388 = vmatpush1.bf16.msra.mxu0 0
    %389 = vmatprep.subr.bf16.mxu0 0
    %390 = vmatpush1.bf16.msra.mxu0 0
    %391 = vmatprep.subr.bf16.mxu0 0
    %392 = vmatpush1.bf16.msra.mxu0 0
    %393 = vmatprep.subr.bf16.mxu0 0
    %394 = vmatpush1.bf16.msra.mxu0 0
    %395 = vmatprep.subr.bf16.mxu0 0
    %396 = vmatpush1.bf16.msra.mxu0 0
    %397 = vmatprep.subr.bf16.mxu0 0
    %398 = vmatpush1.bf16.msra.mxu0 0
    %399 = vmatprep.mubr.bf16.mxu0 0
    %400 = vmatmul.mubr.bf16.gmra.mrb[0].mxu0 %v365
    %v401 = vpop.f32.mrb[0].mxu0
    %v402 = vadd.f32 0.0, %v401
    %v403 = vpop.f32.mrb[0].mxu0
    %v404 = vpop.f32.mrb[0].mxu0
    %v405 = vpop.f32.mrb[0].mxu0
    %406 = vdwg.mxu0
    %v407 = vadd.f32 %v321, %v402
    %v408 = vmul.f32 %v407, %v216
    %v409 = vtanh.pop %v408
    %v410 = vmul.f32 %v409, %v216
    %v411 = vadd.f32 %v410, %v217
    %v412 = vmul.f32 %v411, 0.0
    %414 = vrot.lane.b32.xlu0 %v411, 64
    %v415 = vpop.permute.xlu0 %414
    %v417 = vmul.f32 %v411, %v415
    %419 = vrot.lane.b32.xlu0 %v417, 32
    %v420 = vpop.permute.xlu0 %419
    %v422 = vadd.f32 %v412, %v420
    %v423 = vtanh.pop %v422
    %425 = vrot.lane.b32.xlu0 %v423, 64
    %v426 = vpop.permute.xlu0 %425
    %v428 = vmul.f32 %v411, %v426
    %429 = vmatprep.subr.bf16.mxu0 0
    %430 = vmatpush1.bf16.msra.mxu0 %v226
    %431 = vmatprep.subr.bf16.mxu0 0
    %432 = vmatpush1.bf16.msra.mxu0 %v227
    %433 = vmatprep.subr.bf16.mxu0 0
    %434 = vmatpush1.bf16.msra.mxu0 0
    %435 = vmatprep.subr.bf16.mxu0 0
    %436 = vmatpush1.bf16.msra.mxu0 0
    %437 = vmatprep.subr.bf16.mxu0 0
    %438 = vmatpush1.bf16.msra.mxu0 0
    %439 = vmatprep.subr.bf16.mxu0 0
    %440 = vmatpush1.bf16.msra.mxu0 0
    %441 = vmatprep.subr.bf16.mxu0 0
    %442 = vmatpush1.bf16.msra.mxu0 0
    %443 = vmatprep.subr.bf16.mxu0 0
    %444 = vmatpush1.bf16.msra.mxu0 0
    %445 = vmatprep.subr.bf16.mxu0 0
    %446 = vmatpush1.bf16.msra.mxu0 0
    %447 = vmatprep.subr.bf16.mxu0 0
    %448 = vmatpush1.bf16.msra.mxu0 0
    %449 = vmatprep.subr.bf16.mxu0 0
    %450 = vmatpush1.bf16.msra.mxu0 0
    %451 = vmatprep.subr.bf16.mxu0 0
    %452 = vmatpush1.bf16.msra.mxu0 0
    %453 = vmatprep.subr.bf16.mxu0 0
    %454 = vmatpush1.bf16.msra.mxu0 0
    %455 = vmatprep.subr.bf16.mxu0 0
    %456 = vmatpush1.bf16.msra.mxu0 0
    %457 = vmatprep.subr.bf16.mxu0 0
    %458 = vmatpush1.bf16.msra.mxu0 0
    %459 = vmatprep.subr.bf16.mxu0 0
    %460 = vmatpush1.bf16.msra.mxu0 0
    %461 = vmatprep.mubr.bf16.mxu0 0
    %462 = vmatmul.mubr.bf16.gmra.mrb[0].mxu0 %v365
    %v463 = vpop.f32.mrb[0].mxu0
    %v464 = vadd.f32 0.0, %v463
    %v465 = vpop.f32.mrb[0].mxu0
    %v466 = vpop.f32.mrb[0].mxu0
    %v467 = vpop.f32.mrb[0].mxu0
    %468 = vdwg.mxu0
    %v469 = vpack.c.bf16 %v428, %v428
    %471 = vrot.lane.b32.xlu0 %v469, 32
    %v472 = vpop.permute.xlu0 %471
    %v474 = vsel %vm230, %v472, 0
    %476 = vmatprep.subr.bf16.mxu0 0
    %477 = vmatpush1.bf16.msra.mxu0 %v282
    %478 = vmatprep.subr.bf16.mxu0 0
    %479 = vmatpush1.bf16.msra.mxu0 %v283
    %480 = vmatprep.subr.bf16.mxu0 0
    %481 = vmatpush1.bf16.msra.mxu0 0
    %482 = vmatprep.subr.bf16.mxu0 0
    %483 = vmatpush1.bf16.msra.mxu0 0
    %484 = vmatprep.subr.bf16.mxu0 0
    %485 = vmatpush1.bf16.msra.mxu0 0
    %486 = vmatprep.subr.bf16.mxu0 0
    %487 = vmatpush1.bf16.msra.mxu0 0
    %488 = vmatprep.subr.bf16.mxu0 0
    %489 = vmatpush1.bf16.msra.mxu0 0
    %490 = vmatprep.subr.bf16.mxu0 0
    %491 = vmatpush1.bf16.msra.mxu0 0
    %492 = vmatprep.subr.bf16.mxu0 0
    %493 = vmatpush1.bf16.msra.mxu0 0
    %494 = vmatprep.subr.bf16.mxu0 0
    %495 = vmatpush1.bf16.msra.mxu0 0
    %496 = vmatprep.subr.bf16.mxu0 0
    %497 = vmatpush1.bf16.msra.mxu0 0
    %498 = vmatprep.subr.bf16.mxu0 0
    %499 = vmatpush1.bf16.msra.mxu0 0
    %500 = vmatprep.subr.bf16.mxu0 0
    %501 = vmatpush1.bf16.msra.mxu0 0
    %502 = vmatprep.subr.bf16.mxu0 0
    %503 = vmatpush1.bf16.msra.mxu0 0
    %504 = vmatprep.subr.bf16.mxu0 0
    %505 = vmatpush1.bf16.msra.mxu0 0
    %506 = vmatprep.subr.bf16.mxu0 0
    %507 = vmatpush1.bf16.msra.mxu0 0
    %508 = vmatprep.mubr.bf16.mxu0 0
    %509 = vmatmul.mubr.bf16.gmra.mrb[0].mxu0 %v474
    %v510 = vpop.f32.mrb[0].mxu0
    %v511 = vadd.f32 %v90, %v510
    %v512 = vpop.f32.mrb[0].mxu0
    %v513 = vpop.f32.mrb[0].mxu0
    %v514 = vpop.f32.mrb[0].mxu0
    %515 = vdwg.mxu0
    %v516 = vadd.f32 %v184, %v464
    %v517 = vmul.f32 %v516, %v216
    %v518 = vtanh.pop %v517
    %v519 = vmul.f32 %v518, %v216
    %v520 = vadd.f32 %v519, %v217
    %v521 = vmul.f32 %v520, %v341
    %523 = vrot.lane.b32.xlu0 %v520, 64
    %v524 = vpop.permute.xlu0 %523
    %v526 = vmul.f32 %v520, %v524
    %528 = vrot.lane.b32.xlu0 %v526, 32
    %v529 = vpop.permute.xlu0 %528
    %v531 = vadd.f32 %v521, %v529
    %v532 = vtanh.pop %v531
    %534 = vrot.lane.b32.xlu0 %v532, 64
    %v535 = vpop.permute.xlu0 %534
    %v537 = vmul.f32 %v520, %v535
    %v538 = vpack.c.bf16 %v537, %v537
    %540 = vrot.lane.b32.xlu0 %v538, 32
    %v541 = vpop.permute.xlu0 %540
    %v543 = vsel %vm230, %v541, 0
    %545 = vmatprep.subr.bf16.mxu0 0
    %546 = vmatpush1.bf16.msra.mxu0 %v360
    %547 = vmatprep.subr.bf16.mxu0 0
    %548 = vmatpush1.bf16.msra.mxu0 %v361
    %549 = vmatprep.subr.bf16.mxu0 0
    %550 = vmatpush1.bf16.msra.mxu0 0
    %551 = vmatprep.subr.bf16.mxu0 0
    %552 = vmatpush1.bf16.msra.mxu0 0
    %553 = vmatprep.subr.bf16.mxu0 0
    %554 = vmatpush1.bf16.msra.mxu0 0
    %555 = vmatprep.subr.bf16.mxu0 0
    %556 = vmatpush1.bf16.msra.mxu0 0
    %557 = vmatprep.subr.bf16.mxu0 0
    %558 = vmatpush1.bf16.msra.mxu0 0
    %559 = vmatprep.subr.bf16.mxu0 0
    %560 = vmatpush1.bf16.msra.mxu0 0
    %561 = vmatprep.subr.bf16.mxu0 0
    %562 = vmatpush1.bf16.msra.mxu0 0
    %563 = vmatprep.subr.bf16.mxu0 0
    %564 = vmatpush1.bf16.msra.mxu0 0
    %565 = vmatprep.subr.bf16.mxu0 0
    %566 = vmatpush1.bf16.msra.mxu0 0
    %567 = vmatprep.subr.bf16.mxu0 0
    %568 = vmatpush1.bf16.msra.mxu0 0
    %569 = vmatprep.subr.bf16.mxu0 0
    %570 = vmatpush1.bf16.msra.mxu0 0
    %571 = vmatprep.subr.bf16.mxu0 0
    %572 = vmatpush1.bf16.msra.mxu0 0
    %573 = vmatprep.subr.bf16.mxu0 0
    %574 = vmatpush1.bf16.msra.mxu0 0
    %575 = vmatprep.subr.bf16.mxu0 0
    %576 = vmatpush1.bf16.msra.mxu0 0
    %577 = vmatprep.mubr.bf16.mxu0 0
    %578 = vmatmul.mubr.bf16.gmra.mrb[0].mxu0 %v543
    %v579 = vpop.f32.mrb[0].mxu0
    %v580 = vadd.f32 0.0, %v579
    %v581 = vpop.f32.mrb[0].mxu0
    %v582 = vpop.f32.mrb[0].mxu0
    %v583 = vpop.f32.mrb[0].mxu0
    %584 = vdwg.mxu0
    %v585 = vadd.f32 %v511, %v580
    %v586 = vmul.f32 %v585, %v216
    %v587 = vtanh.pop %v586
    %v588 = vmul.f32 %v587, %v216
    %v589 = vadd.f32 %v588, %v217
    %v590 = vmul.f32 %v589, %v422
    %592 = vrot.lane.b32.xlu0 %v589, 64
    %v593 = vpop.permute.xlu0 %592
    %v595 = vmul.f32 %v589, %v593
    %597 = vrot.lane.b32.xlu0 %v595, 32
    %v598 = vpop.permute.xlu0 %597
    %v600 = vadd.f32 %v590, %v598
    %v601 = vtanh.pop %v600
    %603 = vrot.lane.b32.xlu0 %v601, 64
    %v604 = vpop.permute.xlu0 %603
    %v606 = vmul.f32 %v589, %v604
    %607 = vmatprep.subr.bf16.mxu0 0
    %608 = vmatpush1.bf16.msra.mxu0 %v226
    %609 = vmatprep.subr.bf16.mxu0 0
    %610 = vmatpush1.bf16.msra.mxu0 %v227
    %611 = vmatprep.subr.bf16.mxu0 0
    %612 = vmatpush1.bf16.msra.mxu0 0
    %613 = vmatprep.subr.bf16.mxu0 0
    %614 = vmatpush1.bf16.msra.mxu0 0
    %615 = vmatprep.subr.bf16.mxu0 0
    %616 = vmatpush1.bf16.msra.mxu0 0
    %617 = vmatprep.subr.bf16.mxu0 0
    %618 = vmatpush1.bf16.msra.mxu0 0
    %619 = vmatprep.subr.bf16.mxu0 0
    %620 = vmatpush1.bf16.msra.mxu0 0
    %621 = vmatprep.subr.bf16.mxu0 0
    %622 = vmatpush1.bf16.msra.mxu0 0
    %623 = vmatprep.subr.bf16.mxu0 0
    %624 = vmatpush1.bf16.msra.mxu0 0
    %625 = vmatprep.subr.bf16.mxu0 0
    %626 = vmatpush1.bf16.msra.mxu0 0
    %627 = vmatprep.subr.bf16.mxu0 0
    %628 = vmatpush1.bf16.msra.mxu0 0
    %629 = vmatprep.subr.bf16.mxu0 0
    %630 = vmatpush1.bf16.msra.mxu0 0
    %631 = vmatprep.subr.bf16.mxu0 0
    %632 = vmatpush1.bf16.msra.mxu0 0
    %633 = vmatprep.subr.bf16.mxu0 0
    %634 = vmatpush1.bf16.msra.mxu0 0
    %635 = vmatprep.subr.bf16.mxu0 0
    %636 = vmatpush1.bf16.msra.mxu0 0
    %637 = vmatprep.subr.bf16.mxu0 0
    %638 = vmatpush1.bf16.msra.mxu0 0
    %639 = vmatprep.mubr.bf16.mxu0 0
    %640 = vmatmul.mubr.bf16.gmra.mrb[0].mxu0 %v543
    %v641 = vpop.f32.mrb[0].mxu0
    %v642 = vadd.f32 0.0, %v641
    %v643 = vpop.f32.mrb[0].mxu0
    %v644 = vpop.f32.mrb[0].mxu0
    %v645 = vpop.f32.mrb[0].mxu0
    %646 = vdwg.mxu0
    %v647 = vpack.c.bf16 %v606, %v606
    %649 = vrot.lane.b32.xlu0 %v647, 32
    %v650 = vpop.permute.xlu0 %649
    %v652 = vsel %vm230, %v650, 0
    %654 = vmatprep.subr.bf16.mxu0 0
    %655 = vmatpush1.bf16.msra.mxu0 %v282
    %656 = vmatprep.subr.bf16.mxu0 0
    %657 = vmatpush1.bf16.msra.mxu0 %v283
    %658 = vmatprep.subr.bf16.mxu0 0
    %659 = vmatpush1.bf16.msra.mxu0 0
    %660 = vmatprep.subr.bf16.mxu0 0
    %661 = vmatpush1.bf16.msra.mxu0 0
    %662 = vmatprep.subr.bf16.mxu0 0
    %663 = vmatpush1.bf16.msra.mxu0 0
    %664 = vmatprep.subr.bf16.mxu0 0
    %665 = vmatpush1.bf16.msra.mxu0 0
    %666 = vmatprep.subr.bf16.mxu0 0
    %667 = vmatpush1.bf16.msra.mxu0 0
    %668 = vmatprep.subr.bf16.mxu0 0
    %669 = vmatpush1.bf16.msra.mxu0 0
    %670 = vmatprep.subr.bf16.mxu0 0
    %671 = vmatpush1.bf16.msra.mxu0 0
    %672 = vmatprep.subr.bf16.mxu0 0
    %673 = vmatpush1.bf16.msra.mxu0 0
    %674 = vmatprep.subr.bf16.mxu0 0
    %675 = vmatpush1.bf16.msra.mxu0 0
    %676 = vmatprep.subr.bf16.mxu0 0
    %677 = vmatpush1.bf16.msra.mxu0 0
    %678 = vmatprep.subr.bf16.mxu0 0
    %679 = vmatpush1.bf16.msra.mxu0 0
    %680 = vmatprep.subr.bf16.mxu0 0
    %681 = vmatpush1.bf16.msra.mxu0 0
    %682 = vmatprep.subr.bf16.mxu0 0
    %683 = vmatpush1.bf16.msra.mxu0 0
    %684 = vmatprep.subr.bf16.mxu0 0
    %685 = vmatpush1.bf16.msra.mxu0 0
    %686 = vmatprep.mubr.bf16.mxu0 0
    %687 = vmatmul.mubr.bf16.gmra.mrb[0].mxu0 %v652
    %v688 = vpop.f32.mrb[0].mxu0
    %v689 = vadd.f32 %v90, %v688
    %v690 = vpop.f32.mrb[0].mxu0
    %v691 = vpop.f32.mrb[0].mxu0
    %v692 = vpop.f32.mrb[0].mxu0
    %693 = vdwg.mxu0
    %v694 = vadd.f32 %v189, %v642
    %v695 = vmul.f32 %v694, %v216
    %v696 = vtanh.pop %v695
    %v697 = vmul.f32 %v696, %v216
    %v698 = vadd.f32 %v697, %v217
    %v699 = vmul.f32 %v698, %v531
    %701 = vrot.lane.b32.xlu0 %v698, 64
    %v702 = vpop.permute.xlu0 %701
    %v704 = vmul.f32 %v698, %v702
    %706 = vrot.lane.b32.xlu0 %v704, 32
    %v707 = vpop.permute.xlu0 %706
    %v709 = vadd.f32 %v699, %v707
    %v710 = vtanh.pop %v709
    %712 = vrot.lane.b32.xlu0 %v710, 64
    %v713 = vpop.permute.xlu0 %712
    %v715 = vmul.f32 %v698, %v713
    %v716 = vpack.c.bf16 %v715, %v715
    %718 = vrot.lane.b32.xlu0 %v716, 32
    %v719 = vpop.permute.xlu0 %718
    %v721 = vsel %vm230, %v719, 0
    %723 = vmatprep.subr.bf16.mxu0 0
    %724 = vmatpush1.bf16.msra.mxu0 %v360
    %725 = vmatprep.subr.bf16.mxu0 0
    %726 = vmatpush1.bf16.msra.mxu0 %v361
    %727 = vmatprep.subr.bf16.mxu0 0
    %728 = vmatpush1.bf16.msra.mxu0 0
    %729 = vmatprep.subr.bf16.mxu0 0
    %730 = vmatpush1.bf16.msra.mxu0 0
    %731 = vmatprep.subr.bf16.mxu0 0
    %732 = vmatpush1.bf16.msra.mxu0 0
    %733 = vmatprep.subr.bf16.mxu0 0
    %734 = vmatpush1.bf16.msra.mxu0 0
    %735 = vmatprep.subr.bf16.mxu0 0
    %736 = vmatpush1.bf16.msra.mxu0 0
    %737 = vmatprep.subr.bf16.mxu0 0
    %738 = vmatpush1.bf16.msra.mxu0 0
    %739 = vmatprep.subr.bf16.mxu0 0
    %740 = vmatpush1.bf16.msra.mxu0 0
    %741 = vmatprep.subr.bf16.mxu0 0
    %742 = vmatpush1.bf16.msra.mxu0 0
    %743 = vmatprep.subr.bf16.mxu0 0
    %744 = vmatpush1.bf16.msra.mxu0 0
    %745 = vmatprep.subr.bf16.mxu0 0
    %746 = vmatpush1.bf16.msra.mxu0 0
    %747 = vmatprep.subr.bf16.mxu0 0
    %748 = vmatpush1.bf16.msra.mxu0 0
    %749 = vmatprep.subr.bf16.mxu0 0
    %750 = vmatpush1.bf16.msra.mxu0 0
    %751 = vmatprep.subr.bf16.mxu0 0
    %752 = vmatpush1.bf16.msra.mxu0 0
    %753 = vmatprep.subr.bf16.mxu0 0
    %754 = vmatpush1.bf16.msra.mxu0 0
    %755 = vmatprep.mubr.bf16.mxu0 0
    %756 = vmatmul.mubr.bf16.gmra.mrb[0].mxu0 %v721
    %v757 = vpop.f32.mrb[0].mxu0
    %v758 = vadd.f32 0.0, %v757
    %v759 = vpop.f32.mrb[0].mxu0
    %v760 = vpop.f32.mrb[0].mxu0
    %v761 = vpop.f32.mrb[0].mxu0
    %762 = vdwg.mxu0
    %v763 = vadd.f32 %v689, %v758
    %v764 = vmul.f32 %v763, %v216
    %v765 = vtanh.pop %v764
    %v766 = vmul.f32 %v765, %v216
    %v767 = vadd.f32 %v766, %v217
    %v768 = vmul.f32 %v767, %v600
    %770 = vrot.lane.b32.xlu0 %v767, 64
    %v771 = vpop.permute.xlu0 %770
    %v773 = vmul.f32 %v767, %v771
    %775 = vrot.lane.b32.xlu0 %v773, 32
    %v776 = vpop.permute.xlu0 %775
    %v778 = vadd.f32 %v768, %v776
    %v779 = vtanh.pop %v778
    %781 = vrot.lane.b32.xlu0 %v779, 64
    %v782 = vpop.permute.xlu0 %781
    %v784 = vmul.f32 %v767, %v782
    %785 = vmatprep.subr.bf16.mxu0 0
    %786 = vmatpush1.bf16.msra.mxu0 %v226
    %787 = vmatprep.subr.bf16.mxu0 0
    %788 = vmatpush1.bf16.msra.mxu0 %v227
    %789 = vmatprep.subr.bf16.mxu0 0
    %790 = vmatpush1.bf16.msra.mxu0 0
    %791 = vmatprep.subr.bf16.mxu0 0
    %792 = vmatpush1.bf16.msra.mxu0 0
    %793 = vmatprep.subr.bf16.mxu0 0
    %794 = vmatpush1.bf16.msra.mxu0 0
    %795 = vmatprep.subr.bf16.mxu0 0
    %796 = vmatpush1.bf16.msra.mxu0 0
    %797 = vmatprep.subr.bf16.mxu0 0
    %798 = vmatpush1.bf16.msra.mxu0 0
    %799 = vmatprep.subr.bf16.mxu0 0
    %800 = vmatpush1.bf16.msra.mxu0 0
    %801 = vmatprep.subr.bf16.mxu0 0
    %802 = vmatpush1.bf16.msra.mxu0 0
    %803 = vmatprep.subr.bf16.mxu0 0
    %804 = vmatpush1.bf16.msra.mxu0 0
    %805 = vmatprep.subr.bf16.mxu0 0
    %806 = vmatpush1.bf16.msra.mxu0 0
    %807 = vmatprep.subr.bf16.mxu0 0
    %808 = vmatpush1.bf16.msra.mxu0 0
    %809 = vmatprep.subr.bf16.mxu0 0
    %810 = vmatpush1.bf16.msra.mxu0 0
    %811 = vmatprep.subr.bf16.mxu0 0
    %812 = vmatpush1.bf16.msra.mxu0 0
    %813 = vmatprep.subr.bf16.mxu0 0
    %814 = vmatpush1.bf16.msra.mxu0 0
    %815 = vmatprep.subr.bf16.mxu0 0
    %816 = vmatpush1.bf16.msra.mxu0 0
    %817 = vmatprep.mubr.bf16.mxu0 0
    %818 = vmatmul.mubr.bf16.gmra.mrb[0].mxu0 %v721
    %v819 = vpop.f32.mrb[0].mxu0
    %v820 = vadd.f32 0.0, %v819
    %v821 = vpop.f32.mrb[0].mxu0
    %v822 = vpop.f32.mrb[0].mxu0
    %v823 = vpop.f32.mrb[0].mxu0
    %824 = vdwg.mxu0
    %v825 = vpack.c.bf16 %v784, %v784
    %827 = vrot.lane.b32.xlu0 %v825, 32
    %v828 = vpop.permute.xlu0 %827
    %v830 = vsel %vm230, %v828, 0
    %832 = vmatprep.subr.bf16.mxu0 0
    %833 = vmatpush1.bf16.msra.mxu0 %v282
    %834 = vmatprep.subr.bf16.mxu0 0
    %835 = vmatpush1.bf16.msra.mxu0 %v283
    %836 = vmatprep.subr.bf16.mxu0 0
    %837 = vmatpush1.bf16.msra.mxu0 0
    %838 = vmatprep.subr.bf16.mxu0 0
    %839 = vmatpush1.bf16.msra.mxu0 0
    %840 = vmatprep.subr.bf16.mxu0 0
    %841 = vmatpush1.bf16.msra.mxu0 0
    %842 = vmatprep.subr.bf16.mxu0 0
    %843 = vmatpush1.bf16.msra.mxu0 0
    %844 = vmatprep.subr.bf16.mxu0 0
    %845 = vmatpush1.bf16.msra.mxu0 0
    %846 = vmatprep.subr.bf16.mxu0 0
    %847 = vmatpush1.bf16.msra.mxu0 0
    %848 = vmatprep.subr.bf16.mxu0 0
    %849 = vmatpush1.bf16.msra.mxu0 0
    %850 = vmatprep.subr.bf16.mxu0 0
    %851 = vmatpush1.bf16.msra.mxu0 0
    %852 = vmatprep.subr.bf16.mxu0 0
    %853 = vmatpush1.bf16.msra.mxu0 0
    %854 = vmatprep.subr.bf16.mxu0 0
    %855 = vmatpush1.bf16.msra.mxu0 0
    %856 = vmatprep.subr.bf16.mxu0 0
    %857 = vmatpush1.bf16.msra.mxu0 0
    %858 = vmatprep.subr.bf16.mxu0 0
    %859 = vmatpush1.bf16.msra.mxu0 0
    %860 = vmatprep.subr.bf16.mxu0 0
    %861 = vmatpush1.bf16.msra.mxu0 0
    %862 = vmatprep.subr.bf16.mxu0 0
    %863 = vmatpush1.bf16.msra.mxu0 0
    %864 = vmatprep.mubr.bf16.mxu0 0
    %865 = vmatmul.mubr.bf16.gmra.mrb[0].mxu0 %v830
    %v866 = vpop.f32.mrb[0].mxu0
    %v867 = vadd.f32 %v90, %v866
    %v868 = vpop.f32.mrb[0].mxu0
    %v869 = vpop.f32.mrb[0].mxu0
    %v870 = vpop.f32.mrb[0].mxu0
    %871 = vdwg.mxu0
    %v872 = vadd.f32 %v192, %v820
    %v873 = vmul.f32 %v872, %v216
    %v874 = vtanh.pop %v873
    %v875 = vmul.f32 %v874, %v216
    %v876 = vadd.f32 %v875, %v217
    %v877 = vmul.f32 %v876, %v709
    %879 = vrot.lane.b32.xlu0 %v876, 64
    %v880 = vpop.permute.xlu0 %879
    %v882 = vmul.f32 %v876, %v880
    %884 = vrot.lane.b32.xlu0 %v882, 32
    %v885 = vpop.permute.xlu0 %884
    %v887 = vadd.f32 %v877, %v885
    %v888 = vtanh.pop %v887
    %890 = vrot.lane.b32.xlu0 %v888, 64
    %v891 = vpop.permute.xlu0 %890
    %v893 = vmul.f32 %v876, %v891
    %v894 = vpack.c.bf16 %v893, %v893
    %896 = vrot.lane.b32.xlu0 %v894, 32
    %v897 = vpop.permute.xlu0 %896
    %v899 = vsel %vm230, %v897, 0
    %901 = vmatprep.subr.bf16.mxu0 0
    %902 = vmatpush1.bf16.msra.mxu0 %v360
    %903 = vmatprep.subr.bf16.mxu0 0
    %904 = vmatpush1.bf16.msra.mxu0 %v361
    %905 = vmatprep.subr.bf16.mxu0 0
    %906 = vmatpush1.bf16.msra.mxu0 0
    %907 = vmatprep.subr.bf16.mxu0 0
    %908 = vmatpush1.bf16.msra.mxu0 0
    %909 = vmatprep.subr.bf16.mxu0 0
    %910 = vmatpush1.bf16.msra.mxu0 0
    %911 = vmatprep.subr.bf16.mxu0 0
    %912 = vmatpush1.bf16.msra.mxu0 0
    %913 = vmatprep.subr.bf16.mxu0 0
    %914 = vmatpush1.bf16.msra.mxu0 0
    %915 = vmatprep.subr.bf16.mxu0 0
    %916 = vmatpush1.bf16.msra.mxu0 0
    %917 = vmatprep.subr.bf16.mxu0 0
    %918 = vmatpush1.bf16.msra.mxu0 0
    %919 = vmatprep.subr.bf16.mxu0 0
    %920 = vmatpush1.bf16.msra.mxu0 0
    %921 = vmatprep.subr.bf16.mxu0 0
    %922 = vmatpush1.bf16.msra.mxu0 0
    %923 = vmatprep.subr.bf16.mxu0 0
    %924 = vmatpush1.bf16.msra.mxu0 0
    %925 = vmatprep.subr.bf16.mxu0 0
    %926 = vmatpush1.bf16.msra.mxu0 0
    %927 = vmatprep.subr.bf16.mxu0 0
    %928 = vmatpush1.bf16.msra.mxu0 0
    %929 = vmatprep.subr.bf16.mxu0 0
    %930 = vmatpush1.bf16.msra.mxu0 0
    %931 = vmatprep.subr.bf16.mxu0 0
    %932 = vmatpush1.bf16.msra.mxu0 0
    %933 = vmatprep.mubr.bf16.mxu0 0
    %934 = vmatmul.mubr.bf16.gmra.mrb[0].mxu0 %v899
    %v935 = vpop.f32.mrb[0].mxu0
    %v936 = vadd.f32 0.0, %v935
    %v937 = vpop.f32.mrb[0].mxu0
    %v938 = vpop.f32.mrb[0].mxu0
    %v939 = vpop.f32.mrb[0].mxu0
    %940 = vdwg.mxu0
    %v941 = vadd.f32 %v867, %v936
    %v942 = vmul.f32 %v941, %v216
    %v943 = vtanh.pop %v942
    %v944 = vmul.f32 %v943, %v216
    %v945 = vadd.f32 %v944, %v217
    %v946 = vmul.f32 %v945, %v778
    %948 = vrot.lane.b32.xlu0 %v945, 64
    %v949 = vpop.permute.xlu0 %948
    %v951 = vmul.f32 %v945, %v949
    %953 = vrot.lane.b32.xlu0 %v951, 32
    %v954 = vpop.permute.xlu0 %953
    %v956 = vadd.f32 %v946, %v954
    %v957 = vtanh.pop %v956
    %959 = vrot.lane.b32.xlu0 %v957, 64
    %v960 = vpop.permute.xlu0 %959
    %v962 = vmul.f32 %v945, %v960
    %963 = vmatprep.subr.bf16.mxu0 0
    %964 = vmatpush1.bf16.msra.mxu0 %v226
    %965 = vmatprep.subr.bf16.mxu0 0
    %966 = vmatpush1.bf16.msra.mxu0 %v227
    %967 = vmatprep.subr.bf16.mxu0 0
    %968 = vmatpush1.bf16.msra.mxu0 0
    %969 = vmatprep.subr.bf16.mxu0 0
    %970 = vmatpush1.bf16.msra.mxu0 0
    %971 = vmatprep.subr.bf16.mxu0 0
    %972 = vmatpush1.bf16.msra.mxu0 0
    %973 = vmatprep.subr.bf16.mxu0 0
    %974 = vmatpush1.bf16.msra.mxu0 0
    %975 = vmatprep.subr.bf16.mxu0 0
    %976 = vmatpush1.bf16.msra.mxu0 0
    %977 = vmatprep.subr.bf16.mxu0 0
    %978 = vmatpush1.bf16.msra.mxu0 0
    %979 = vmatprep.subr.bf16.mxu0 0
    %980 = vmatpush1.bf16.msra.mxu0 0
    %981 = vmatprep.subr.bf16.mxu0 0
    %982 = vmatpush1.bf16.msra.mxu0 0
    %983 = vmatprep.subr.bf16.mxu0 0
    %984 = vmatpush1.bf16.msra.mxu0 0
    %985 = vmatprep.subr.bf16.mxu0 0
    %986 = vmatpush1.bf16.msra.mxu0 0
    %987 = vmatprep.subr.bf16.mxu0 0
    %988 = vmatpush1.bf16.msra.mxu0 0
    %989 = vmatprep.subr.bf16.mxu0 0
    %990 = vmatpush1.bf16.msra.mxu0 0
    %991 = vmatprep.subr.bf16.mxu0 0
    %992 = vmatpush1.bf16.msra.mxu0 0
    %993 = vmatprep.subr.bf16.mxu0 0
    %994 = vmatpush1.bf16.msra.mxu0 0
    %995 = vmatprep.mubr.bf16.mxu0 0
    %996 = vmatmul.mubr.bf16.gmra.mrb[0].mxu0 %v899
    %v997 = vpop.f32.mrb[0].mxu0
    %v998 = vadd.f32 0.0, %v997
    %v999 = vpop.f32.mrb[0].mxu0
    %v1000 = vpop.f32.mrb[0].mxu0
    %v1001 = vpop.f32.mrb[0].mxu0
    %1002 = vdwg.mxu0
    %v1003 = vpack.c.bf16 %v962, %v962
    %1005 = vrot.lane.b32.xlu0 %v1003, 32
    %v1006 = vpop.permute.xlu0 %1005
    %v1008 = vsel %vm230, %v1006, 0
    %1010 = vmatprep.subr.bf16.mxu0 0
    %1011 = vmatpush1.bf16.msra.mxu0 %v282
    %1012 = vmatprep.subr.bf16.mxu0 0
    %1013 = vmatpush1.bf16.msra.mxu0 %v283
    %1014 = vmatprep.subr.bf16.mxu0 0
    %1015 = vmatpush1.bf16.msra.mxu0 0
    %1016 = vmatprep.subr.bf16.mxu0 0
    %1017 = vmatpush1.bf16.msra.mxu0 0
    %1018 = vmatprep.subr.bf16.mxu0 0
    %1019 = vmatpush1.bf16.msra.mxu0 0
    %1020 = vmatprep.subr.bf16.mxu0 0
    %1021 = vmatpush1.bf16.msra.mxu0 0
    %1022 = vmatprep.subr.bf16.mxu0 0
    %1023 = vmatpush1.bf16.msra.mxu0 0
    %1024 = vmatprep.subr.bf16.mxu0 0
    %1025 = vmatpush1.bf16.msra.mxu0 0
    %1026 = vmatprep.subr.bf16.mxu0 0
    %1027 = vmatpush1.bf16.msra.mxu0 0
    %1028 = vmatprep.subr.bf16.mxu0 0
    %1029 = vmatpush1.bf16.msra.mxu0 0
    %1030 = vmatprep.subr.bf16.mxu0 0
    %1031 = vmatpush1.bf16.msra.mxu0 0
    %1032 = vmatprep.subr.bf16.mxu0 0
    %1033 = vmatpush1.bf16.msra.mxu0 0
    %1034 = vmatprep.subr.bf16.mxu0 0
    %1035 = vmatpush1.bf16.msra.mxu0 0
    %1036 = vmatprep.subr.bf16.mxu0 0
    %1037 = vmatpush1.bf16.msra.mxu0 0
    %1038 = vmatprep.subr.bf16.mxu0 0
    %1039 = vmatpush1.bf16.msra.mxu0 0
    %1040 = vmatprep.subr.bf16.mxu0 0
    %1041 = vmatpush1.bf16.msra.mxu0 0
    %1042 = vmatprep.mubr.bf16.mxu0 0
    %1043 = vmatmul.mubr.bf16.gmra.mrb[0].mxu0 %v1008
    %v1044 = vpop.f32.mrb[0].mxu0
    %v1045 = vadd.f32 %v90, %v1044
    %v1046 = vpop.f32.mrb[0].mxu0
    %v1047 = vpop.f32.mrb[0].mxu0
    %v1048 = vpop.f32.mrb[0].mxu0
    %1049 = vdwg.mxu0
    %v1050 = vadd.f32 %v197, %v998
    %v1051 = vmul.f32 %v1050, %v216
    %v1052 = vtanh.pop %v1051
    %v1053 = vmul.f32 %v1052, %v216
    %v1054 = vadd.f32 %v1053, %v217
    %v1055 = vmul.f32 %v1054, %v887
    %1057 = vrot.lane.b32.xlu0 %v1054, 64
    %v1058 = vpop.permute.xlu0 %1057
    %v1060 = vmul.f32 %v1054, %v1058
    %1062 = vrot.lane.b32.xlu0 %v1060, 32
    %v1063 = vpop.permute.xlu0 %1062
    %v1065 = vadd.f32 %v1055, %v1063
    %v1066 = vtanh.pop %v1065
    %1068 = vrot.lane.b32.xlu0 %v1066, 64
    %v1069 = vpop.permute.xlu0 %1068
    %v1071 = vmul.f32 %v1054, %v1069
    %v1072 = vpack.c.bf16 %v1071, %v1071
    %1074 = vrot.lane.b32.xlu0 %v1072, 32
    %v1075 = vpop.permute.xlu0 %1074
    %v1077 = vsel %vm230, %v1075, 0
    %1079 = vmatprep.subr.bf16.mxu0 0
    %1080 = vmatpush1.bf16.msra.mxu0 %v360
    %1081 = vmatprep.subr.bf16.mxu0 0
    %1082 = vmatpush1.bf16.msra.mxu0 %v361
    %1083 = vmatprep.subr.bf16.mxu0 0
    %1084 = vmatpush1.bf16.msra.mxu0 0
    %1085 = vmatprep.subr.bf16.mxu0 0
    %1086 = vmatpush1.bf16.msra.mxu0 0
    %1087 = vmatprep.subr.bf16.mxu0 0
    %1088 = vmatpush1.bf16.msra.mxu0 0
    %1089 = vmatprep.subr.bf16.mxu0 0
    %1090 = vmatpush1.bf16.msra.mxu0 0
    %1091 = vmatprep.subr.bf16.mxu0 0
    %1092 = vmatpush1.bf16.msra.mxu0 0
    %1093 = vmatprep.subr.bf16.mxu0 0
    %1094 = vmatpush1.bf16.msra.mxu0 0
    %1095 = vmatprep.subr.bf16.mxu0 0
    %1096 = vmatpush1.bf16.msra.mxu0 0
    %1097 = vmatprep.subr.bf16.mxu0 0
    %1098 = vmatpush1.bf16.msra.mxu0 0
    %1099 = vmatprep.subr.bf16.mxu0 0
    %1100 = vmatpush1.bf16.msra.mxu0 0
    %1101 = vmatprep.subr.bf16.mxu0 0
    %1102 = vmatpush1.bf16.msra.mxu0 0
    %1103 = vmatprep.subr.bf16.mxu0 0
    %1104 = vmatpush1.bf16.msra.mxu0 0
    %1105 = vmatprep.subr.bf16.mxu0 0
    %1106 = vmatpush1.bf16.msra.mxu0 0
    %1107 = vmatprep.subr.bf16.mxu0 0
    %1108 = vmatpush1.bf16.msra.mxu0 0
    %1109 = vmatprep.subr.bf16.mxu0 0
    %1110 = vmatpush1.bf16.msra.mxu0 0
    %1111 = vmatprep.mubr.bf16.mxu0 0
    %1112 = vmatmul.mubr.bf16.gmra.mrb[0].mxu0 %v1077
    %v1113 = vpop.f32.mrb[0].mxu0
    %v1114 = vadd.f32 0.0, %v1113
    %v1115 = vpop.f32.mrb[0].mxu0
    %v1116 = vpop.f32.mrb[0].mxu0
    %v1117 = vpop.f32.mrb[0].mxu0
    %1118 = vdwg.mxu0
    %v1119 = vadd.f32 %v1045, %v1114
    %v1120 = vmul.f32 %v1119, %v216
    %v1121 = vtanh.pop %v1120
    %v1122 = vmul.f32 %v1121, %v216
    %v1123 = vadd.f32 %v1122, %v217
    %v1124 = vmul.f32 %v1123, %v956
    %1126 = vrot.lane.b32.xlu0 %v1123, 64
    %v1127 = vpop.permute.xlu0 %1126
    %v1129 = vmul.f32 %v1123, %v1127
    %1131 = vrot.lane.b32.xlu0 %v1129, 32
    %v1132 = vpop.permute.xlu0 %1131
    %v1134 = vadd.f32 %v1124, %v1132
    %v1135 = vtanh.pop %v1134
    %1137 = vrot.lane.b32.xlu0 %v1135, 64
    %v1138 = vpop.permute.xlu0 %1137
    %v1140 = vmul.f32 %v1123, %v1138
    %1141 = vmatprep.subr.bf16.mxu0 0
    %1142 = vmatpush1.bf16.msra.mxu0 %v226
    %1143 = vmatprep.subr.bf16.mxu0 0
    %1144 = vmatpush1.bf16.msra.mxu0 %v227
    %1145 = vmatprep.subr.bf16.mxu0 0
    %1146 = vmatpush1.bf16.msra.mxu0 0
    %1147 = vmatprep.subr.bf16.mxu0 0
    %1148 = vmatpush1.bf16.msra.mxu0 0
    %1149 = vmatprep.subr.bf16.mxu0 0
    %1150 = vmatpush1.bf16.msra.mxu0 0
    %1151 = vmatprep.subr.bf16.mxu0 0
    %1152 = vmatpush1.bf16.msra.mxu0 0
    %1153 = vmatprep.subr.bf16.mxu0 0
    %1154 = vmatpush1.bf16.msra.mxu0 0
    %1155 = vmatprep.subr.bf16.mxu0 0
    %1156 = vmatpush1.bf16.msra.mxu0 0
    %1157 = vmatprep.subr.bf16.mxu0 0
    %1158 = vmatpush1.bf16.msra.mxu0 0
    %1159 = vmatprep.subr.bf16.mxu0 0
    %1160 = vmatpush1.bf16.msra.mxu0 0
    %1161 = vmatprep.subr.bf16.mxu0 0
    %1162 = vmatpush1.bf16.msra.mxu0 0
    %1163 = vmatprep.subr.bf16.mxu0 0
    %1164 = vmatpush1.bf16.msra.mxu0 0
    %1165 = vmatprep.subr.bf16.mxu0 0
    %1166 = vmatpush1.bf16.msra.mxu0 0
    %1167 = vmatprep.subr.bf16.mxu0 0
    %1168 = vmatpush1.bf16.msra.mxu0 0
    %1169 = vmatprep.subr.bf16.mxu0 0
    %1170 = vmatpush1.bf16.msra.mxu0 0
    %1171 = vmatprep.subr.bf16.mxu0 0
    %1172 = vmatpush1.bf16.msra.mxu0 0
    %1173 = vmatprep.mubr.bf16.mxu0 0
    %1174 = vmatmul.mubr.bf16.gmra.mrb[0].mxu0 %v1077
    %v1175 = vpop.f32.mrb[0].mxu0
    %v1176 = vadd.f32 0.0, %v1175
    %v1177 = vpop.f32.mrb[0].mxu0
    %v1178 = vpop.f32.mrb[0].mxu0
    %v1179 = vpop.f32.mrb[0].mxu0
    %1180 = vdwg.mxu0
    %v1181 = vpack.c.bf16 %v1140, %v1140
    %1183 = vrot.lane.b32.xlu0 %v1181, 32
    %v1184 = vpop.permute.xlu0 %1183
    %v1186 = vsel %vm230, %v1184, 0
    %1188 = vmatprep.subr.bf16.mxu0 0
    %1189 = vmatpush1.bf16.msra.mxu0 %v282
    %1190 = vmatprep.subr.bf16.mxu0 0
    %1191 = vmatpush1.bf16.msra.mxu0 %v283
    %1192 = vmatprep.subr.bf16.mxu0 0
    %1193 = vmatpush1.bf16.msra.mxu0 0
    %1194 = vmatprep.subr.bf16.mxu0 0
    %1195 = vmatpush1.bf16.msra.mxu0 0
    %1196 = vmatprep.subr.bf16.mxu0 0
    %1197 = vmatpush1.bf16.msra.mxu0 0
    %1198 = vmatprep.subr.bf16.mxu0 0
    %1199 = vmatpush1.bf16.msra.mxu0 0
    %1200 = vmatprep.subr.bf16.mxu0 0
    %1201 = vmatpush1.bf16.msra.mxu0 0
    %1202 = vmatprep.subr.bf16.mxu0 0
    %1203 = vmatpush1.bf16.msra.mxu0 0
    %1204 = vmatprep.subr.bf16.mxu0 0
    %1205 = vmatpush1.bf16.msra.mxu0 0
    %1206 = vmatprep.subr.bf16.mxu0 0
    %1207 = vmatpush1.bf16.msra.mxu0 0
    %1208 = vmatprep.subr.bf16.mxu0 0
    %1209 = vmatpush1.bf16.msra.mxu0 0
    %1210 = vmatprep.subr.bf16.mxu0 0
    %1211 = vmatpush1.bf16.msra.mxu0 0
    %1212 = vmatprep.subr.bf16.mxu0 0
    %1213 = vmatpush1.bf16.msra.mxu0 0
    %1214 = vmatprep.subr.bf16.mxu0 0
    %1215 = vmatpush1.bf16.msra.mxu0 0
    %1216 = vmatprep.subr.bf16.mxu0 0
    %1217 = vmatpush1.bf16.msra.mxu0 0
    %1218 = vmatprep.subr.bf16.mxu0 0
    %1219 = vmatpush1.bf16.msra.mxu0 0
    %1220 = vmatprep.mubr.bf16.mxu0 0
    %1221 = vmatmul.mubr.bf16.gmra.mrb[0].mxu0 %v1186
    %v1222 = vpop.f32.mrb[0].mxu0
    %v1223 = vadd.f32 %v90, %v1222
    %v1224 = vpop.f32.mrb[0].mxu0
    %v1225 = vpop.f32.mrb[0].mxu0
    %v1226 = vpop.f32.mrb[0].mxu0
    %1227 = vdwg.mxu0
    %v1228 = vadd.f32 %v200, %v1176
    %v1229 = vmul.f32 %v1228, %v216
    %v1230 = vtanh.pop %v1229
    %v1231 = vmul.f32 %v1230, %v216
    %v1232 = vadd.f32 %v1231, %v217
    %v1233 = vmul.f32 %v1232, %v1065
    %1235 = vrot.lane.b32.xlu0 %v1232, 64
    %v1236 = vpop.permute.xlu0 %1235
    %v1238 = vmul.f32 %v1232, %v1236
    %1240 = vrot.lane.b32.xlu0 %v1238, 32
    %v1241 = vpop.permute.xlu0 %1240
    %v1243 = vadd.f32 %v1233, %v1241
    %v1244 = vtanh.pop %v1243
    %1246 = vrot.lane.b32.xlu0 %v1244, 64
    %v1247 = vpop.permute.xlu0 %1246
    %v1249 = vmul.f32 %v1232, %v1247
    %v1250 = vpack.c.bf16 %v1249, %v1249
    %1252 = vrot.lane.b32.xlu0 %v1250, 32
    %v1253 = vpop.permute.xlu0 %1252
    %v1255 = vsel %vm230, %v1253, 0
    %1257 = vmatprep.subr.bf16.mxu0 0
    %1258 = vmatpush1.bf16.msra.mxu0 %v360
    %1259 = vmatprep.subr.bf16.mxu0 0
    %1260 = vmatpush1.bf16.msra.mxu0 %v361
    %1261 = vmatprep.subr.bf16.mxu0 0
    %1262 = vmatpush1.bf16.msra.mxu0 0
    %1263 = vmatprep.subr.bf16.mxu0 0
    %1264 = vmatpush1.bf16.msra.mxu0 0
    %1265 = vmatprep.subr.bf16.mxu0 0
    %1266 = vmatpush1.bf16.msra.mxu0 0
    %1267 = vmatprep.subr.bf16.mxu0 0
    %1268 = vmatpush1.bf16.msra.mxu0 0
    %1269 = vmatprep.subr.bf16.mxu0 0
    %1270 = vmatpush1.bf16.msra.mxu0 0
    %1271 = vmatprep.subr.bf16.mxu0 0
    %1272 = vmatpush1.bf16.msra.mxu0 0
    %1273 = vmatprep.subr.bf16.mxu0 0
    %1274 = vmatpush1.bf16.msra.mxu0 0
    %1275 = vmatprep.subr.bf16.mxu0 0
    %1276 = vmatpush1.bf16.msra.mxu0 0
    %1277 = vmatprep.subr.bf16.mxu0 0
    %1278 = vmatpush1.bf16.msra.mxu0 0
    %1279 = vmatprep.subr.bf16.mxu0 0
    %1280 = vmatpush1.bf16.msra.mxu0 0
    %1281 = vmatprep.subr.bf16.mxu0 0
    %1282 = vmatpush1.bf16.msra.mxu0 0
    %1283 = vmatprep.subr.bf16.mxu0 0
    %1284 = vmatpush1.bf16.msra.mxu0 0
    %1285 = vmatprep.subr.bf16.mxu0 0
    %1286 = vmatpush1.bf16.msra.mxu0 0
    %1287 = vmatprep.subr.bf16.mxu0 0
    %1288 = vmatpush1.bf16.msra.mxu0 0
    %1289 = vmatprep.mubr.bf16.mxu0 0
    %1290 = vmatmul.mubr.bf16.gmra.mrb[0].mxu0 %v1255
    %v1291 = vpop.f32.mrb[0].mxu0
    %v1292 = vadd.f32 0.0, %v1291
    %v1293 = vpop.f32.mrb[0].mxu0
    %v1294 = vpop.f32.mrb[0].mxu0
    %v1295 = vpop.f32.mrb[0].mxu0
    %1296 = vdwg.mxu0
    %v1297 = vadd.f32 %v1223, %v1292
    %v1298 = vmul.f32 %v1297, %v216
    %v1299 = vtanh.pop %v1298
    %v1300 = vmul.f32 %v1299, %v216
    %v1301 = vadd.f32 %v1300, %v217
    %v1302 = vmul.f32 %v1301, %v1134
    %1304 = vrot.lane.b32.xlu0 %v1301, 64
    %v1305 = vpop.permute.xlu0 %1304
    %v1307 = vmul.f32 %v1301, %v1305
    %1309 = vrot.lane.b32.xlu0 %v1307, 32
    %v1310 = vpop.permute.xlu0 %1309
    %v1312 = vadd.f32 %v1302, %v1310
    %v1313 = vtanh.pop %v1312
    %1315 = vrot.lane.b32.xlu0 %v1313, 64
    %v1316 = vpop.permute.xlu0 %1315
    %v1318 = vmul.f32 %v1301, %v1316
    %1319 = vmatprep.subr.bf16.mxu0 0
    %1320 = vmatpush1.bf16.msra.mxu0 %v226
    %1321 = vmatprep.subr.bf16.mxu0 0
    %1322 = vmatpush1.bf16.msra.mxu0 %v227
    %1323 = vmatprep.subr.bf16.mxu0 0
    %1324 = vmatpush1.bf16.msra.mxu0 0
    %1325 = vmatprep.subr.bf16.mxu0 0
    %1326 = vmatpush1.bf16.msra.mxu0 0
    %1327 = vmatprep.subr.bf16.mxu0 0
    %1328 = vmatpush1.bf16.msra.mxu0 0
    %1329 = vmatprep.subr.bf16.mxu0 0
    %1330 = vmatpush1.bf16.msra.mxu0 0
    %1331 = vmatprep.subr.bf16.mxu0 0
    %1332 = vmatpush1.bf16.msra.mxu0 0
    %1333 = vmatprep.subr.bf16.mxu0 0
    %1334 = vmatpush1.bf16.msra.mxu0 0
    %1335 = vmatprep.subr.bf16.mxu0 0
    %1336 = vmatpush1.bf16.msra.mxu0 0
    %1337 = vmatprep.subr.bf16.mxu0 0
    %1338 = vmatpush1.bf16.msra.mxu0 0
    %1339 = vmatprep.subr.bf16.mxu0 0
    %1340 = vmatpush1.bf16.msra.mxu0 0
    %1341 = vmatprep.subr.bf16.mxu0 0
    %1342 = vmatpush1.bf16.msra.mxu0 0
    %1343 = vmatprep.subr.bf16.mxu0 0
    %1344 = vmatpush1.bf16.msra.mxu0 0
    %1345 = vmatprep.subr.bf16.mxu0 0
    %1346 = vmatpush1.bf16.msra.mxu0 0
    %1347 = vmatprep.subr.bf16.mxu0 0
    %1348 = vmatpush1.bf16.msra.mxu0 0
    %1349 = vmatprep.subr.bf16.mxu0 0
    %1350 = vmatpush1.bf16.msra.mxu0 0
    %1351 = vmatprep.mubr.bf16.mxu0 0
    %1352 = vmatmul.mubr.bf16.gmra.mrb[0].mxu0 %v1255
    %v1353 = vpop.f32.mrb[0].mxu0
    %v1354 = vadd.f32 0.0, %v1353
    %v1355 = vpop.f32.mrb[0].mxu0
    %v1356 = vpop.f32.mrb[0].mxu0
    %v1357 = vpop.f32.mrb[0].mxu0
    %1358 = vdwg.mxu0
    %v1359 = vpack.c.bf16 %v1318, %v1318
    %1361 = vrot.lane.b32.xlu0 %v1359, 32
    %v1362 = vpop.permute.xlu0 %1361
    %v1364 = vsel %vm230, %v1362, 0
    %1366 = vmatprep.subr.bf16.mxu0 0
    %1367 = vmatpush1.bf16.msra.mxu0 %v282
    %1368 = vmatprep.subr.bf16.mxu0 0
    %1369 = vmatpush1.bf16.msra.mxu0 %v283
    %1370 = vmatprep.subr.bf16.mxu0 0
    %1371 = vmatpush1.bf16.msra.mxu0 0
    %1372 = vmatprep.subr.bf16.mxu0 0
    %1373 = vmatpush1.bf16.msra.mxu0 0
    %1374 = vmatprep.subr.bf16.mxu0 0
    %1375 = vmatpush1.bf16.msra.mxu0 0
    %1376 = vmatprep.subr.bf16.mxu0 0
    %1377 = vmatpush1.bf16.msra.mxu0 0
    %1378 = vmatprep.subr.bf16.mxu0 0
    %1379 = vmatpush1.bf16.msra.mxu0 0
    %1380 = vmatprep.subr.bf16.mxu0 0
    %1381 = vmatpush1.bf16.msra.mxu0 0
    %1382 = vmatprep.subr.bf16.mxu0 0
    %1383 = vmatpush1.bf16.msra.mxu0 0
    %1384 = vmatprep.subr.bf16.mxu0 0
    %1385 = vmatpush1.bf16.msra.mxu0 0
    %1386 = vmatprep.subr.bf16.mxu0 0
    %1387 = vmatpush1.bf16.msra.mxu0 0
    %1388 = vmatprep.subr.bf16.mxu0 0
    %1389 = vmatpush1.bf16.msra.mxu0 0
    %1390 = vmatprep.subr.bf16.mxu0 0
    %1391 = vmatpush1.bf16.msra.mxu0 0
    %1392 = vmatprep.subr.bf16.mxu0 0
    %1393 = vmatpush1.bf16.msra.mxu0 0
    %1394 = vmatprep.subr.bf16.mxu0 0
    %1395 = vmatpush1.bf16.msra.mxu0 0
    %1396 = vmatprep.subr.bf16.mxu0 0
    %1397 = vmatpush1.bf16.msra.mxu0 0
    %1398 = vmatprep.mubr.bf16.mxu0 0
    %1399 = vmatmul.mubr.bf16.gmra.mrb[0].mxu0 %v1364
    %v1400 = vpop.f32.mrb[0].mxu0
    %v1401 = vadd.f32 %v90, %v1400
    %v1402 = vpop.f32.mrb[0].mxu0
    %v1403 = vpop.f32.mrb[0].mxu0
    %v1404 = vpop.f32.mrb[0].mxu0
    %1405 = vdwg.mxu0
    %v1406 = vadd.f32 %v205, %v1354
    %v1407 = vmul.f32 %v1406, %v216
    %v1408 = vtanh.pop %v1407
    %v1409 = vmul.f32 %v1408, %v216
    %v1410 = vadd.f32 %v1409, %v217
    %v1411 = vmul.f32 %v1410, %v1243
    %1413 = vrot.lane.b32.xlu0 %v1410, 64
    %v1414 = vpop.permute.xlu0 %1413
    %v1416 = vmul.f32 %v1410, %v1414
    %1418 = vrot.lane.b32.xlu0 %v1416, 32
    %v1419 = vpop.permute.xlu0 %1418
    %v1421 = vadd.f32 %v1411, %v1419
    %v1422 = vtanh.pop %v1421
    %1424 = vrot.lane.b32.xlu0 %v1422, 64
    %v1425 = vpop.permute.xlu0 %1424
    %v1427 = vmul.f32 %v1410, %v1425
    %v1428 = vpack.c.bf16 %v1427, %v1427
    %1430 = vrot.lane.b32.xlu0 %v1428, 32
    %v1431 = vpop.permute.xlu0 %1430
    %v1433 = vsel %vm230, %v1431, 0
    %1435 = vmatprep.subr.bf16.mxu0 0
    %1436 = vmatpush1.bf16.msra.mxu0 %v360
    %1437 = vmatprep.subr.bf16.mxu0 0
    %1438 = vmatpush1.bf16.msra.mxu0 %v361
    %1439 = vmatprep.subr.bf16.mxu0 0
    %1440 = vmatpush1.bf16.msra.mxu0 0
    %1441 = vmatprep.subr.bf16.mxu0 0
    %1442 = vmatpush1.bf16.msra.mxu0 0
    %1443 = vmatprep.subr.bf16.mxu0 0
    %1444 = vmatpush1.bf16.msra.mxu0 0
    %1445 = vmatprep.subr.bf16.mxu0 0
    %1446 = vmatpush1.bf16.msra.mxu0 0
    %1447 = vmatprep.subr.bf16.mxu0 0
    %1448 = vmatpush1.bf16.msra.mxu0 0
    %1449 = vmatprep.subr.bf16.mxu0 0
    %1450 = vmatpush1.bf16.msra.mxu0 0
    %1451 = vmatprep.subr.bf16.mxu0 0
    %1452 = vmatpush1.bf16.msra.mxu0 0
    %1453 = vmatprep.subr.bf16.mxu0 0
    %1454 = vmatpush1.bf16.msra.mxu0 0
    %1455 = vmatprep.subr.bf16.mxu0 0
    %1456 = vmatpush1.bf16.msra.mxu0 0
    %1457 = vmatprep.subr.bf16.mxu0 0
    %1458 = vmatpush1.bf16.msra.mxu0 0
    %1459 = vmatprep.subr.bf16.mxu0 0
    %1460 = vmatpush1.bf16.msra.mxu0 0
    %1461 = vmatprep.subr.bf16.mxu0 0
    %1462 = vmatpush1.bf16.msra.mxu0 0
    %1463 = vmatprep.subr.bf16.mxu0 0
    %1464 = vmatpush1.bf16.msra.mxu0 0
    %1465 = vmatprep.subr.bf16.mxu0 0
    %1466 = vmatpush1.bf16.msra.mxu0 0
    %1467 = vmatprep.mubr.bf16.mxu0 0
    %1468 = vmatmul.mubr.bf16.gmra.mrb[0].mxu0 %v1433
    %v1469 = vpop.f32.mrb[0].mxu0
    %v1470 = vadd.f32 0.0, %v1469
    %v1471 = vpop.f32.mrb[0].mxu0
    %v1472 = vpop.f32.mrb[0].mxu0
    %v1473 = vpop.f32.mrb[0].mxu0
    %1474 = vdwg.mxu0
    %v1475 = vadd.f32 %v1401, %v1470
    %v1476 = vmul.f32 %v1475, %v216
    %v1477 = vtanh.pop %v1476
    %v1478 = vmul.f32 %v1477, %v216
    %v1479 = vadd.f32 %v1478, %v217
    %v1480 = vmul.f32 %v1479, %v1312
    %1482 = vrot.lane.b32.xlu0 %v1479, 64
    %v1483 = vpop.permute.xlu0 %1482
    %v1485 = vmul.f32 %v1479, %v1483
    %1487 = vrot.lane.b32.xlu0 %v1485, 32
    %v1488 = vpop.permute.xlu0 %1487
    %v1490 = vadd.f32 %v1480, %v1488
    %v1491 = vtanh.pop %v1490
    %1493 = vrot.lane.b32.xlu0 %v1491, 64
    %v1494 = vpop.permute.xlu0 %1493
    %v1496 = vmul.f32 %v1479, %v1494
    %1497 = vmatprep.subr.bf16.mxu0 0
    %1498 = vmatpush1.bf16.msra.mxu0 %v226
    %1499 = vmatprep.subr.bf16.mxu0 0
    %1500 = vmatpush1.bf16.msra.mxu0 %v227
    %1501 = vmatprep.subr.bf16.mxu0 0
    %1502 = vmatpush1.bf16.msra.mxu0 0
    %1503 = vmatprep.subr.bf16.mxu0 0
    %1504 = vmatpush1.bf16.msra.mxu0 0
    %1505 = vmatprep.subr.bf16.mxu0 0
    %1506 = vmatpush1.bf16.msra.mxu0 0
    %1507 = vmatprep.subr.bf16.mxu0 0
    %1508 = vmatpush1.bf16.msra.mxu0 0
    %1509 = vmatprep.subr.bf16.mxu0 0
    %1510 = vmatpush1.bf16.msra.mxu0 0
    %1511 = vmatprep.subr.bf16.mxu0 0
    %1512 = vmatpush1.bf16.msra.mxu0 0
    %1513 = vmatprep.subr.bf16.mxu0 0
    %1514 = vmatpush1.bf16.msra.mxu0 0
    %1515 = vmatprep.subr.bf16.mxu0 0
    %1516 = vmatpush1.bf16.msra.mxu0 0
    %1517 = vmatprep.subr.bf16.mxu0 0
    %1518 = vmatpush1.bf16.msra.mxu0 0
    %1519 = vmatprep.subr.bf16.mxu0 0
    %1520 = vmatpush1.bf16.msra.mxu0 0
    %1521 = vmatprep.subr.bf16.mxu0 0
    %1522 = vmatpush1.bf16.msra.mxu0 0
    %1523 = vmatprep.subr.bf16.mxu0 0
    %1524 = vmatpush1.bf16.msra.mxu0 0
    %1525 = vmatprep.subr.bf16.mxu0 0
    %1526 = vmatpush1.bf16.msra.mxu0 0
    %1527 = vmatprep.subr.bf16.mxu0 0
    %1528 = vmatpush1.bf16.msra.mxu0 0
    %1529 = vmatprep.mubr.bf16.mxu0 0
    %1530 = vmatmul.mubr.bf16.gmra.mrb[0].mxu0 %v1433
    %v1531 = vpop.f32.mrb[0].mxu0
    %v1532 = vadd.f32 0.0, %v1531
    %v1533 = vpop.f32.mrb[0].mxu0
    %v1534 = vpop.f32.mrb[0].mxu0
    %v1535 = vpop.f32.mrb[0].mxu0
    %1536 = vdwg.mxu0
    %v1537 = vpack.c.bf16 %v1496, %v1496
    %1539 = vrot.lane.b32.xlu0 %v1537, 32
    %v1540 = vpop.permute.xlu0 %1539
    %v1542 = vsel %vm230, %v1540, 0
    %1544 = vmatprep.subr.bf16.mxu0 0
    %1545 = vmatpush1.bf16.msra.mxu0 %v282
    %1546 = vmatprep.subr.bf16.mxu0 0
    %1547 = vmatpush1.bf16.msra.mxu0 %v283
    %1548 = vmatprep.subr.bf16.mxu0 0
    %1549 = vmatpush1.bf16.msra.mxu0 0
    %1550 = vmatprep.subr.bf16.mxu0 0
    %1551 = vmatpush1.bf16.msra.mxu0 0
    %1552 = vmatprep.subr.bf16.mxu0 0
    %1553 = vmatpush1.bf16.msra.mxu0 0
    %1554 = vmatprep.subr.bf16.mxu0 0
    %1555 = vmatpush1.bf16.msra.mxu0 0
    %1556 = vmatprep.subr.bf16.mxu0 0
    %1557 = vmatpush1.bf16.msra.mxu0 0
    %1558 = vmatprep.subr.bf16.mxu0 0
    %1559 = vmatpush1.bf16.msra.mxu0 0
    %1560 = vmatprep.subr.bf16.mxu0 0
    %1561 = vmatpush1.bf16.msra.mxu0 0
    %1562 = vmatprep.subr.bf16.mxu0 0
    %1563 = vmatpush1.bf16.msra.mxu0 0
    %1564 = vmatprep.subr.bf16.mxu0 0
    %1565 = vmatpush1.bf16.msra.mxu0 0
    %1566 = vmatprep.subr.bf16.mxu0 0
    %1567 = vmatpush1.bf16.msra.mxu0 0
    %1568 = vmatprep.subr.bf16.mxu0 0
    %1569 = vmatpush1.bf16.msra.mxu0 0
    %1570 = vmatprep.subr.bf16.mxu0 0
    %1571 = vmatpush1.bf16.msra.mxu0 0
    %1572 = vmatprep.subr.bf16.mxu0 0
    %1573 = vmatpush1.bf16.msra.mxu0 0
    %1574 = vmatprep.subr.bf16.mxu0 0
    %1575 = vmatpush1.bf16.msra.mxu0 0
    %1576 = vmatprep.mubr.bf16.mxu0 0
    %1577 = vmatmul.mubr.bf16.gmra.mrb[0].mxu0 %v1542
    %v1578 = vpop.f32.mrb[0].mxu0
    %v1579 = vadd.f32 %v90, %v1578
    %v1580 = vpop.f32.mrb[0].mxu0
    %v1581 = vpop.f32.mrb[0].mxu0
    %v1582 = vpop.f32.mrb[0].mxu0
    %1583 = vdwg.mxu0
    %v1584 = vadd.f32 %v208, %v1532
    %v1585 = vmul.f32 %v1584, %v216
    %v1586 = vtanh.pop %v1585
    %v1587 = vmul.f32 %v1586, %v216
    %v1588 = vadd.f32 %v1587, %v217
    %v1589 = vmul.f32 %v1588, %v1421
    %1591 = vrot.lane.b32.xlu0 %v1588, 64
    %v1592 = vpop.permute.xlu0 %1591
    %v1594 = vmul.f32 %v1588, %v1592
    %1596 = vrot.lane.b32.xlu0 %v1594, 32
    %v1597 = vpop.permute.xlu0 %1596
    %v1599 = vadd.f32 %v1589, %v1597
    %v1600 = vtanh.pop %v1599
    %1602 = vrot.lane.b32.xlu0 %v1600, 64
    %v1603 = vpop.permute.xlu0 %1602
    %v1605 = vmul.f32 %v1588, %v1603
    %v1606 = vpack.c.bf16 %v1605, %v1605
    %1608 = vrot.lane.b32.xlu0 %v1606, 32
    %v1609 = vpop.permute.xlu0 %1608
    %v1611 = vsel %vm230, %v1609, 0
    %1613 = vmatprep.subr.bf16.mxu0 0
    %1614 = vmatpush1.bf16.msra.mxu0 %v360
    %1615 = vmatprep.subr.bf16.mxu0 0
    %1616 = vmatpush1.bf16.msra.mxu0 %v361
    %1617 = vmatprep.subr.bf16.mxu0 0
    %1618 = vmatpush1.bf16.msra.mxu0 0
    %1619 = vmatprep.subr.bf16.mxu0 0
    %1620 = vmatpush1.bf16.msra.mxu0 0
    %1621 = vmatprep.subr.bf16.mxu0 0
    %1622 = vmatpush1.bf16.msra.mxu0 0
    %1623 = vmatprep.subr.bf16.mxu0 0
    %1624 = vmatpush1.bf16.msra.mxu0 0
    %1625 = vmatprep.subr.bf16.mxu0 0
    %1626 = vmatpush1.bf16.msra.mxu0 0
    %1627 = vmatprep.subr.bf16.mxu0 0
    %1628 = vmatpush1.bf16.msra.mxu0 0
    %1629 = vmatprep.subr.bf16.mxu0 0
    %1630 = vmatpush1.bf16.msra.mxu0 0
    %1631 = vmatprep.subr.bf16.mxu0 0
    %1632 = vmatpush1.bf16.msra.mxu0 0
    %1633 = vmatprep.subr.bf16.mxu0 0
    %1634 = vmatpush1.bf16.msra.mxu0 0
    %1635 = vmatprep.subr.bf16.mxu0 0
    %1636 = vmatpush1.bf16.msra.mxu0 0
    %1637 = vmatprep.subr.bf16.mxu0 0
    %1638 = vmatpush1.bf16.msra.mxu0 0
    %1639 = vmatprep.subr.bf16.mxu0 0
    %1640 = vmatpush1.bf16.msra.mxu0 0
    %1641 = vmatprep.subr.bf16.mxu0 0
    %1642 = vmatpush1.bf16.msra.mxu0 0
    %1643 = vmatprep.subr.bf16.mxu0 0
    %1644 = vmatpush1.bf16.msra.mxu0 0
    %1645 = vmatprep.mubr.bf16.mxu0 0
    %1646 = vmatmul.mubr.bf16.gmra.mrb[0].mxu0 %v1611
    %v1647 = vpop.f32.mrb[0].mxu0
    %v1648 = vadd.f32 0.0, %v1647
    %v1649 = vpop.f32.mrb[0].mxu0
    %v1650 = vpop.f32.mrb[0].mxu0
    %v1651 = vpop.f32.mrb[0].mxu0
    %1652 = vdwg.mxu0
    %v1653 = vadd.f32 %v1579, %v1648
    %v1654 = vmul.f32 %v1653, %v216
    %v1655 = vtanh.pop %v1654
    %v1656 = vmul.f32 %v1655, %v216
    %v1657 = vadd.f32 %v1656, %v217
    %v1658 = vmul.f32 %v1657, %v1490
    %1660 = vrot.lane.b32.xlu0 %v1657, 64
    %v1661 = vpop.permute.xlu0 %1660
    %v1663 = vmul.f32 %v1657, %v1661
    %1665 = vrot.lane.b32.xlu0 %v1663, 32
    %v1666 = vpop.permute.xlu0 %1665
    %v1668 = vadd.f32 %v1658, %v1666
    %v1669 = vtanh.pop %v1668
    %1671 = vrot.lane.b32.xlu0 %v1669, 64
    %v1672 = vpop.permute.xlu0 %1671
    %v1674 = vmul.f32 %v1657, %v1672
    %v1675 = vpack.c.bf16 %v1674, %v1674
    %v1676 = vld [vmem:[#allocation7] sm:$0xf]
    %v1677 = vld [vmem:[#allocation7 + $0x4] sm:$0xf]
    %v1678 = vld [vmem:[#allocation7 + $0x8] sm:$0xf]
    %v1679 = vld [vmem:[#allocation7 + $0xc] sm:$0xf]
    %v1680 = vld [vmem:[%s8] sm:$0x1]
    %v1682 = vlaneseq
    %v1683 = vshrl.u32 %v1682, 7
    %v1684 = vsub.s32 0, %v1683
    %v1685 = vrot.slane %v1680, %v1684
    %1688 = vrot.lane.b32.xlu0 %v1675, 32
    %v1689 = vpop.permute.xlu0 %1688
    %v1694 = vunpack.c.l.b16 %v1676
    %v1695 = vunpack.c.l.b16 %v1677
    %v1696 = vunpack.c.l.b16 %v1678
    %v1697 = vunpack.c.l.b16 %v1679
    %v1698 = vpack.c.b16 %v1695, %v1694
    %v1699 = vpack.c.b16 %v1697, %v1696
    %v1703 = vsel %vm230, %v1689, 0
    %1705 = vmatprep.subr.bf16.mxu0 0
    %1706 = vmatpush1.bf16.msra.mxu0 %v1698
    %1707 = vmatprep.subr.bf16.mxu0 0
    %1708 = vmatpush1.bf16.msra.mxu0 %v1699
    %1709 = vmatprep.subr.bf16.mxu0 0
    %1710 = vmatpush1.bf16.msra.mxu0 0
    %1711 = vmatprep.subr.bf16.mxu0 0
    %1712 = vmatpush1.bf16.msra.mxu0 0
    %1713 = vmatprep.subr.bf16.mxu0 0
    %1714 = vmatpush1.bf16.msra.mxu0 0
    %1715 = vmatprep.subr.bf16.mxu0 0
    %1716 = vmatpush1.bf16.msra.mxu0 0
    %1717 = vmatprep.subr.bf16.mxu0 0
    %1718 = vmatpush1.bf16.msra.mxu0 0
    %1719 = vmatprep.subr.bf16.mxu0 0
    %1720 = vmatpush1.bf16.msra.mxu0 0
    %1721 = vmatprep.subr.bf16.mxu0 0
    %1722 = vmatpush1.bf16.msra.mxu0 0
    %1723 = vmatprep.subr.bf16.mxu0 0
    %1724 = vmatpush1.bf16.msra.mxu0 0
    %1725 = vmatprep.subr.bf16.mxu0 0
    %1726 = vmatpush1.bf16.msra.mxu0 0
    %1727 = vmatprep.subr.bf16.mxu0 0
    %1728 = vmatpush1.bf16.msra.mxu0 0
    %1729 = vmatprep.subr.bf16.mxu0 0
    %1730 = vmatpush1.bf16.msra.mxu0 0
    %1731 = vmatprep.subr.bf16.mxu0 0
    %1732 = vmatpush1.bf16.msra.mxu0 0
    %1733 = vmatprep.subr.bf16.mxu0 0
    %1734 = vmatpush1.bf16.msra.mxu0 0
    %1735 = vmatprep.subr.bf16.mxu0 0
    %1736 = vmatpush1.bf16.msra.mxu0 0
    %1737 = vmatprep.mubr.bf16.mxu0 0
    %1738 = vmatmul.mubr.bf16.gmra.mrb[0].mxu0 %v1703
    %v1739 = vpop.f32.mrb[0].mxu0
    %v1740 = vadd.f32 %v1685, %v1739
    %v1741 = vpop.f32.mrb[0].mxu0
    %v1742 = vpop.f32.mrb[0].mxu0
    %v1743 = vpop.f32.mrb[0].mxu0
    %1744 = vdwg.mxu0
    %1745 = vst [vmem:[#allocation8] sm:$0xff] %v1740
    // Predicated region
    $region50: #{tpu_custom_call.1} parent=1 // pred_check
      _
    $region51: #{tpu_custom_call.1} parent=1 // pred_check_branch
      %1747 = sbr.rel (0) target = $region53
    $region52: #{tpu_custom_call.1} parent=1 // pred_region
      %s1749 = ssub.s32 128, 128
      %1750 = vsyncadd [#allocation4], %s1749
      %s1752 = sshll.u32 [#allocation8], 4
      %s1753 = int_to_ptr.vmem [resolvable:$true] %s1752
      %1755 = dma.vmem_to_hbm [thread:$0]  %s1753, 128, %s9, [#allocation4]
    $region53: #{tpu_custom_call.1} parent=1 // pred_fallthru
      _
    // Predicated region
    $region54: #{tpu_custom_call.1} parent=1 // pred_check
      _
    $region55: #{tpu_custom_call.1} parent=1 // pred_check_branch
      %1757 = sbr.rel (0) target = $region57
    $region56: #{tpu_custom_call.1} parent=1 // pred_region
      %1758 = dma.done [#allocation4], 128
    $region57: #{tpu_custom_call.1} parent=1 // pred_fallthru
      _
    %1759 = vsyncpa [#allocation3], 1
    %1760 = vsyncpa [#allocation6], 1
    %1761 = vsyncpa [#allocation4], 1

</llo_original>
